<compile_context>
chip_gen: v6e
topology: v6e:2x2x1
jax: 0.10.0
libtpu: 0.0.40
codegen_flags: <defaults>
</compile_context>

<pallas_src>
import jax
import jax.numpy as jnp
from jax.experimental import pallas as pl
from jax.experimental.pallas import tpu as pltpu


def _round_up(x, m):
    return ((x + m - 1) // m) * m


def _vmem_limit_bytes():
    """Per-generation scoped-VMEM limit (v7x has only 64 MiB physical per TC)."""
    try:
        info = pltpu.get_tpu_info()
        cap = getattr(info, "vmem_capacity_bytes", None)
        if cap:
            return int(min(cap * 3 // 4, 96 * 1024 * 1024))
    except Exception:
        pass
    return 48 * 1024 * 1024  # conservative fallback, safe on every generation


def _block_footprint_bytes(tn, tk, tf):
    out_b = tn * tf * 4               # resident f32 accumulator / output block
    adj_b = 2 * tn * tk * 2           # double-buffered bf16 adjacency block
    feat_b = 2 * tk * tf * 2          # double-buffered bf16 pre-scaled feat block
    norm_b = 2 * tn * 512             # (tn, 1) f32 lane-pads to (tn, 128)
    return out_b + adj_b + feat_b + norm_b


# ----------------------------------------------------------------------------
# Fused kernel:  out[i, j] = ndst_i ⊙ sum_k A[i, k] @ sfeat[k, j]
# where sfeat = (norm ⊙ feat) in bf16 (pre-computed in the wrapper).
# Grid = (dst tiles i, feature tiles j, src/reduction tiles k); reduction last.
# The output block index (i, j) is constant across k, so the output block stays
# VMEM-resident and is used directly as the f32 accumulator.
# ----------------------------------------------------------------------------
def mpconv_kernel(adj_ref, sfeat_ref, ndst_ref, out_ref):
    k = pl.program_id(2)

    partial = jnp.dot(adj_ref[...], sfeat_ref[...],          # bf16 MXU,
                      preferred_element_type=jnp.float32)    # f32 accumulation

    @pl.when(k == 0)
    def _first():
        out_ref[...] = partial                               # no zero-init round trip

    @pl.when(k != 0)
    def _accum():
        out_ref[...] += partial

    @pl.when(k == pl.num_programs(2) - 1)
    def _finalize():
        out_ref[...] = out_ref[...] * ndst_ref[...]          # (tn, 1) dst norm


def mpconv_forward(adj, feat):
    """adj: (N, N) dense adjacency A[dst, src]; feat: (N, F) node features."""
    N, F = feat.shape
    assert adj.shape == (N, N)

    # ---- minimal padding (multiples of 128 cover bf16/f32 tiling rules) ----
    Np = _round_up(N, 128)
    Fp = _round_up(F, 128)

    # ---- tile selection ----------------------------------------------------
    vmem_limit = _vmem_limit_bytes()
    budget = max(vmem_limit - 12 * 1024 * 1024, 16 * 1024 * 1024)

    # feature tile: largest candidate dividing Fp (tf == Fp => adjacency read once)
    tf = max(c for c in (2048, 1024, 512, 256, 128) if c <= Fp and Fp % c == 0)
    # reduction (src) tile
    tk = 256 if Np % 256 == 0 else 128
    # dst tile: as large as the VMEM budget allows (cuts feat re-reads)
    tn = 128
    for cand in (2048, 1024, 512, 256, 128):
        if Np % cand == 0 and _block_footprint_bytes(cand, tk, tf) <= budget:
            tn = cand
            break
    # keep >= 2 parallel output tiles when possible (v7x dual TensorCores)
    while (Np // tn) * (Fp // tf) < 2 and tn > 128:
        tn //= 2

    # ---- XLA preprocessing ---------------------------------------------------
    # norm[v] = clamp(in_deg(v), 1) ** -0.5 (in-degree = row sum of A[dst, src]).
    deg = jnp.sum(adj.astype(jnp.float32), axis=1, keepdims=True)       # (N, 1)
    norm = jax.lax.rsqrt(jnp.maximum(deg, 1.0))                         # (N, 1)

    # Pre-scale feat by the src norm (f32), then cast to bf16 once in the wrapper.
    sfeat = (feat.astype(jnp.float32) * norm).astype(jnp.bfloat16)      # (N, F)

    # bf16 adjacency (exact for 0/1); in a multi-layer GCN this cast should be
    # hoisted and the bf16 adjacency reused across layers.
    adj_p = jnp.pad(adj.astype(jnp.bfloat16), ((0, Np - N), (0, Np - N)))
    sfeat_p = jnp.pad(sfeat, ((0, Np - N), (0, Fp - F)))
    norm_p = jnp.pad(norm, ((0, Np - N), (0, 0)))                       # (Np, 1) f32

    grid = (Np // tn, Fp // tf, Np // tk)

    out_p = pl.pallas_call(
        mpconv_kernel,
        out_shape=jax.ShapeDtypeStruct((Np, Fp), jnp.float32),
        grid_spec=pltpu.PrefetchScalarGridSpec(
            num_scalar_prefetch=0,
            grid=grid,
            in_specs=[
                pl.BlockSpec((tn, tk), lambda i, j, k: (i, k)),   # adjacency (bf16)
                pl.BlockSpec((tk, tf), lambda i, j, k: (k, j)),   # pre-scaled feat (bf16)
                pl.BlockSpec((tn, 1), lambda i, j, k: (i, 0)),    # dst norm (f32), k-invariant
            ],
            out_specs=pl.BlockSpec((tn, tf), lambda i, j, k: (i, j)),
        ),
        compiler_params=pltpu.CompilerParams(
            dimension_semantics=("parallel", "parallel", "arbitrary"),
            vmem_limit_bytes=vmem_limit,
        ),
    )(adj_p, sfeat_p, norm_p)

    return out_p[:N, :F]


# ----------------------------------------------------------------------------
# Pure-JAX (f32) reference for verification.
# ----------------------------------------------------------------------------
def mpconv_ref(adj, feat):
    deg = jnp.sum(adj, axis=1, keepdims=True)
    norm = jnp.power(jnp.maximum(deg, 1.0), -0.5)
    h = feat * norm
    h = adj @ h
    return h * norm


if __name__ == "__main__":
    # MPConv has no learnable parameters; only graph + features.
    N, F = 512, 256
    key = jax.random.PRNGKey(0)
    k_adj, k_feat = jax.random.split(key)

    # random sparse-ish directed graph as a dense 0/1 adjacency A[dst, src]
    adj = (jax.random.uniform(k_adj, (N, N)) < 0.05).astype(jnp.float32)
    feat = jax.random.normal(k_feat, (N, F), dtype=jnp.float32)

    out = jax.jit(mpconv_forward)(adj, feat)
    out = jax.block_until_ready(out)

    ref = mpconv_ref(adj, feat)
    err = jnp.max(jnp.abs(out - ref))
    assert out.shape == (N, F)
    # bf16 matmul operands (f32 accumulation) vs. the f32 reference -> relaxed tol.
    assert jnp.allclose(out, ref, atol=2e-2, rtol=2e-2), f"max abs err {err}"

    print("KERNEL_OK")
</pallas_src>

<mosaic_0001>
module attributes {stable_mosaic.version = 11 : i64} {
  func.func @mpconv_kernel(%arg0: i32, %arg1: i32, %arg2: i32, %arg3: memref<256x256xbf16, #tpu.memory_space<vmem>>, %arg4: memref<256x256xbf16, #tpu.memory_space<vmem>>, %arg5: memref<256x1xf32, #tpu.memory_space<vmem>>, %arg6: memref<256x256xf32, #tpu.memory_space<vmem>>) attributes {dimension_semantics = [#tpu.dimension_semantics<parallel>, #tpu.dimension_semantics<parallel>, #tpu.dimension_semantics<arbitrary>], iteration_bounds = array<i64: 2, 1, 2>, scalar_prefetch = 0 : i64, scratch_operands = 0 : i64, tpu.core_type = #tpu.core_type<tc>, window_params = [{transform_indices = @transform_0, window_bounds = array<i64: 256, 256>}, {transform_indices = @transform_1, window_bounds = array<i64: 256, 256>}, {transform_indices = @transform_2, window_bounds = array<i64: 256, 1>}, {transform_indices = @transform_3, window_bounds = array<i64: 256, 256>}]} {
    %c0 = arith.constant 0 : index
    %c0_0 = arith.constant 0 : index
    %0 = vector.load %arg3[%c0, %c0_0] : memref<256x256xbf16, #tpu.memory_space<vmem>>, vector<256x256xbf16>
    %c0_1 = arith.constant 0 : index
    %c0_2 = arith.constant 0 : index
    %1 = vector.load %arg4[%c0_1, %c0_2] : memref<256x256xbf16, #tpu.memory_space<vmem>>, vector<256x256xbf16>
    %cst = arith.constant dense<0.000000e+00> : vector<256x256xf32>
    %2 = tpu.matmul %0, %1, %cst {dimension_numbers = #tpu.dot_dimension_numbers<[1], [0], [0], [1], [0, 0, 1, 1], [], []>} : vector<256x256xbf16>, vector<256x256xbf16>, vector<256x256xf32> -> vector<256x256xf32>
    %c0_i32 = arith.constant 0 : i32
    %3 = arith.cmpi eq, %arg2, %c0_i32 : i32
    %4 = arith.extui %3 : i1 to i32
    %c0_i32_3 = arith.constant 0 : i32
    %5 = arith.cmpi ne, %4, %c0_i32_3 : i32
    scf.if %5 {
      %c0_7 = arith.constant 0 : index
      %c0_8 = arith.constant 0 : index
      %12 = vector.load %arg6[%c0_7, %c0_8] : memref<256x256xf32, #tpu.memory_space<vmem>>, vector<256x256xf32>
      tpu.vector_store %arg6[%c0_7, %c0_8], %2 {strides = array<i32>} : memref<256x256xf32, #tpu.memory_space<vmem>>, vector<256x256xf32>,
    } else {
    }
    %c0_i32_4 = arith.constant 0 : i32
    %6 = arith.cmpi ne, %arg2, %c0_i32_4 : i32
    %7 = arith.extui %6 : i1 to i32
    %c0_i32_5 = arith.constant 0 : i32
    %8 = arith.cmpi ne, %7, %c0_i32_5 : i32
    scf.if %8 {
      %c0_7 = arith.constant 0 : index
      %c0_8 = arith.constant 0 : index
      %12 = vector.load %arg6[%c0_7, %c0_8] : memref<256x256xf32, #tpu.memory_space<vmem>>, vector<256x256xf32>
      %13 = arith.addf %12, %2 : vector<256x256xf32>
      %c0_9 = arith.constant 0 : index
      %c0_10 = arith.constant 0 : index
      %14 = vector.load %arg6[%c0_9, %c0_10] : memref<256x256xf32, #tpu.memory_space<vmem>>, vector<256x256xf32>
      tpu.vector_store %arg6[%c0_9, %c0_10], %13 {strides = array<i32>} : memref<256x256xf32, #tpu.memory_space<vmem>>, vector<256x256xf32>,
    } else {
    }
    %c1_i32 = arith.constant 1 : i32
    %9 = arith.cmpi eq, %arg2, %c1_i32 : i32
    %10 = arith.extui %9 : i1 to i32
    %c0_i32_6 = arith.constant 0 : i32
    %11 = arith.cmpi ne, %10, %c0_i32_6 : i32
    scf.if %11 {
      %c0_7 = arith.constant 0 : index
      %c0_8 = arith.constant 0 : index
      %12 = vector.load %arg6[%c0_7, %c0_8] : memref<256x256xf32, #tpu.memory_space<vmem>>, vector<256x256xf32>
      %c0_9 = arith.constant 0 : index
      %c0_10 = arith.constant 0 : index
      %13 = vector.load %arg5[%c0_9, %c0_10] : memref<256x1xf32, #tpu.memory_space<vmem>>, vector<256x1xf32>
      %14 = vector.broadcast %13 : vector<256x1xf32> to vector<256x256xf32>
      %15 = arith.mulf %12, %14 : vector<256x256xf32>
      %c0_11 = arith.constant 0 : index
      %c0_12 = arith.constant 0 : index
      %16 = vector.load %arg6[%c0_11, %c0_12] : memref<256x256xf32, #tpu.memory_space<vmem>>, vector<256x256xf32>
      tpu.vector_store %arg6[%c0_11, %c0_12], %15 {strides = array<i32>} : memref<256x256xf32, #tpu.memory_space<vmem>>, vector<256x256xf32>,
    } else {
    }
    return
  }
  func.func @transform_0(%arg0: i32, %arg1: i32, %arg2: i32) -> (i32, i32) {
    %c0_i32 = arith.constant 0 : i32
    return %arg0, %arg2 : i32, i32
  }
  func.func @transform_1(%arg0: i32, %arg1: i32, %arg2: i32) -> (i32, i32) {
    %c0_i32 = arith.constant 0 : i32
    return %arg2, %arg1 : i32, i32
  }
  func.func @transform_2(%arg0: i32, %arg1: i32, %arg2: i32) -> (i32, i32) {
    %c0_i32 = arith.constant 0 : i32
    %c0_i32_0 = arith.constant 0 : i32
    return %arg0, %c0_i32 : i32, i32
  }
  func.func @transform_3(%arg0: i32, %arg1: i32, %arg2: i32) -> (i32, i32) {
    %c0_i32 = arith.constant 0 : i32
    return %arg0, %arg1 : i32, i32
  }
}

</mosaic_0001>

<llo_original>
// kernel: mpconv_forward.1
$region0: #{mpconv_forward.1}
  #allocation0 [shape = 'u32[]', space=smem, size = 0x4, offset = 0x4, fixed_abs, tag = 'smem constant byte address 0x4 - core index']
  #allocation1 [shape = 'u32[144,128]{1,0:T(1,128)}', space=vmem, size = 0x12000, scoped, tag = 'internal scratch']
  %s0 = inlined_call_operand.vmem [shape: bf16[512,512], index: 0, kind: input, shape index: {}]
  %s1 = inlined_call_operand.vmem [shape: bf16[512,256], index: 1, kind: input, shape index: {}]
  %s2 = inlined_call_operand.vmem [shape: f32[512,1], index: 2, kind: input, shape index: {}]
  %s3 = inlined_call_operand.hbm [shape: f32[512,256], index: 3, kind: output, shape index: {}]
  %s4 = sld [smem:[#allocation0]]
  $region95: #{mpconv_forward.1} parent=0
    _
  %s6 = ssub.s32 1, %s4
  %s7 = scalar_select 0, %s6, %s4
  $region1: #{mpconv_forward.1} parent=0
    #allocation2 [shape = 'u8[262144]{0}', space=vmem, size = 0x40000, scoped, tag = 'input window, operand 0']
    #allocation3 [shape = 'u8[524288]{0}', space=vmem, size = 0x80000, scoped, tag = 'output window, operand 0']
    #allocation4 [shape = 's32[2]{0}', space=sflag, size = 0x8, scoped, tag = 'scoped memory for mpconv_forward.1']
    %8 = vsyncpa [#allocation4], 0
    %s9 = scalar_lea.sflag [#allocation4], 1
    %10 = vsyncpa %s9, 0
    loop: start=0, step=1, limit=6
    $region2: #{mpconv_forward.1} parent=1 // loop_pre_header
      _
    $region3: #{mpconv_forward.1} parent=1 // loop_header
      %s12 = sphi 0, %s16
      %p13 = scmp.ge.s32.totalorder %s12, 6
      %s19 = sphi 0, %s38
      %s20 = sphi 0, %s34
      %s21 = sphi 0, %s30
      %s22 = sphi 0, %s19
      %s23 = sphi 0, %s20
      %s24 = sphi 0, %s21
      %s25 = sphi 0, %s22
      %s26 = sphi 0, %s23
      %s27 = sphi 0, %s24
      %s43 = sphi 0, %s45
      %s46 = sphi 0, %s43
      %s47 = sphi 0, %s46
      %s63 = sphi 0, %s47
      %s71 = sphi 0, %s73
      %s74 = sphi 0, %s71
      %s75 = sphi 0, %s74
      %s91 = sphi 0, %s75
      %s97 = sphi 0, %s99
      %s100 = sphi 0, %s97
      %s101 = sphi 0, %s100
      %s117 = sphi 0, %s101
      %s125 = sphi 0, %s127
      %s128 = sphi 0, %s125
      %s129 = sphi 0, %s128
      %s145 = sphi 0, %s129
    $region4: #{mpconv_forward.1} parent=1 // loop_header_branch
      %15 = sbr.rel (%p13) target = $region8
    $region5: #{mpconv_forward.1} parent=1 // loop_body
      %s17 = ssub.s32 %s12, 1
      %s18 = ssub.s32 %s12, 2
      %s28 = sadd.s32 1, %s21
      %p29 = scmp.ge.s32.totalorder %s28, 2
      %s30 = scalar_select %p29, 0, %s28
      %s31 = sadd.s32 1, %s20
      %s32 = scalar_select %p29, %s31, %s20
      %p33 = scmp.ge.s32.totalorder %s32, 1
      %s34 = scalar_select %p33, 0, %s32
      %s35 = sadd.s32 1, %s19
      %s36 = scalar_select %p33, %s35, %s19
      %p37 = scmp.ge.s32.totalorder %s36, 2
      %s38 = scalar_select %p37, 0, %s36
      %s39 = ssub.s32 %s19, %s38
      %s40 = ssub.s32 %s21, %s30
      %s41 = sor.u32 %s39, %s40
      %p42 = scmp.eq.s32.totalorder %s41, 0
      %s44 = sadd.s32 %s43, 1
      %s45 = scalar_select %p42, %s43, %s44
      %p48 = pneg %p42
      %p49 = scmp.eq.s32.totalorder %s12, 3
      %p50 = por %p48, %p49
      %p51 = scmp.ne.s32.totalorder %s43, %s46
      %p52 = scmp.eq.s32.totalorder %s12, 0
      %p53 = por %p51, %p52
      %p54 = scmp.ne.s32.totalorder %s43, %s46
      %p55 = scmp.eq.s32.totalorder %s17, 3
      %p56 = por %p54, %p55
      %p57 = scmp.ne.s32.totalorder %s46, %s47
      %p58 = scmp.eq.s32.totalorder %s17, 0
      %p59 = por %p57, %p58
      %p60 = scmp.ne.s32.totalorder %s46, %s47
      %p61 = scmp.eq.s32.totalorder %s18, 3
      %p62 = por %p60, %p61
      %p64 = scmp.ne.s32.totalorder %s47, %s63
      %p65 = scmp.eq.s32.totalorder %s18, 0
      %p66 = por %p64, %p65
      %s67 = ssub.s32 %s21, %s30
      %s68 = ssub.s32 %s20, %s34
      %s69 = sor.u32 %s67, %s68
      %p70 = scmp.eq.s32.totalorder %s69, 0
      %s72 = sadd.s32 %s71, 1
      %s73 = scalar_select %p70, %s71, %s72
      %p76 = pneg %p70
      %p77 = scmp.eq.s32.totalorder %s12, 3
      %p78 = por %p76, %p77
      %p79 = scmp.ne.s32.totalorder %s71, %s74
      %p80 = scmp.eq.s32.totalorder %s12, 0
      %p81 = por %p79, %p80
      %p82 = scmp.ne.s32.totalorder %s71, %s74
      %p83 = scmp.eq.s32.totalorder %s17, 3
      %p84 = por %p82, %p83
      %p85 = scmp.ne.s32.totalorder %s74, %s75
      %p86 = scmp.eq.s32.totalorder %s17, 0
      %p87 = por %p85, %p86
      %p88 = scmp.ne.s32.totalorder %s74, %s75
      %p89 = scmp.eq.s32.totalorder %s18, 3
      %p90 = por %p88, %p89
      %p92 = scmp.ne.s32.totalorder %s75, %s91
      %p93 = scmp.eq.s32.totalorder %s18, 0
      %p94 = por %p92, %p93
      %s95 = ssub.s32 %s19, %s38
      %p96 = scmp.eq.s32.totalorder %s95, 0
      %s98 = sadd.s32 %s97, 1
      %s99 = scalar_select %p96, %s97, %s98
      %p102 = pneg %p96
      %p103 = scmp.eq.s32.totalorder %s12, 3
      %p104 = por %p102, %p103
      %p105 = scmp.ne.s32.totalorder %s97, %s100
      %p106 = scmp.eq.s32.totalorder %s12, 0
      %p107 = por %p105, %p106
      %p108 = scmp.ne.s32.totalorder %s97, %s100
      %p109 = scmp.eq.s32.totalorder %s17, 3
      %p110 = por %p108, %p109
      %p111 = scmp.ne.s32.totalorder %s100, %s101
      %p112 = scmp.eq.s32.totalorder %s17, 0
      %p113 = por %p111, %p112
      %p114 = scmp.ne.s32.totalorder %s100, %s101
      %p115 = scmp.eq.s32.totalorder %s18, 3
      %p116 = por %p114, %p115
      %p118 = scmp.ne.s32.totalorder %s101, %s117
      %p119 = scmp.eq.s32.totalorder %s18, 0
      %p120 = por %p118, %p119
      %s121 = ssub.s32 %s19, %s38
      %s122 = ssub.s32 %s20, %s34
      %s123 = sor.u32 %s121, %s122
      %p124 = scmp.eq.s32.totalorder %s123, 0
      %s126 = sadd.s32 %s125, 1
      %s127 = scalar_select %p124, %s125, %s126
      %p130 = pneg %p124
      %p131 = scmp.eq.s32.totalorder %s12, 3
      %p132 = por %p130, %p131
      %p133 = scmp.ne.s32.totalorder %s125, %s128
      %p134 = scmp.eq.s32.totalorder %s12, 0
      %p135 = por %p133, %p134
      %p136 = scmp.ne.s32.totalorder %s125, %s128
      %p137 = scmp.eq.s32.totalorder %s17, 3
      %p138 = por %p136, %p137
      %p139 = scmp.ne.s32.totalorder %s128, %s129
      %p140 = scmp.eq.s32.totalorder %s17, 0
      %p141 = por %p139, %p140
      %p142 = scmp.ne.s32.totalorder %s128, %s129
      %p143 = scmp.eq.s32.totalorder %s18, 3
      %p144 = por %p142, %p143
      %p146 = scmp.ne.s32.totalorder %s129, %s145
      %p147 = scmp.eq.s32.totalorder %s18, 0
      %p148 = por %p146, %p147
      %p149 = scmp.le.s32.totalorder 1, %s12
      %p150 = scmp.lt.s32.totalorder %s12, 5
      %p151 = pnand %p149, %p150
      %p152 = pneg %p151
      // Predicated region
      $region9: #{mpconv_forward.1} parent=5 // pred_check
        _
      $region10: #{mpconv_forward.1} parent=5 // pred_check_branch
        %154 = sbr.rel (%p151) target = $region12
      $region11: #{mpconv_forward.1} parent=5 // pred_region
        %s155 = ssub.s32 %s12, 1
      $region12: #{mpconv_forward.1} parent=5 // pred_fallthru
        _
      %p156 = scmp.lt.s32.totalorder %s12, 4
      // Predicated region
      $region13: #{mpconv_forward.1} parent=5 // pred_check
        %p157 = pneg %p156
      $region14: #{mpconv_forward.1} parent=5 // pred_check_branch
        %159 = sbr.rel (%p157) target = $region16
      $region15: #{mpconv_forward.1} parent=5 // pred_region
        // Predicated region
        $region17: #{mpconv_forward.1} parent=15 // pred_check
          %p160 = pneg %p53
        $region18: #{mpconv_forward.1} parent=15 // pred_check_branch
          %162 = sbr.rel (%p160) target = $region20
        $region19: #{mpconv_forward.1} parent=15 // pred_region
          %s163 = sand.u32 %s43, 1
          %s164 = sand.u32 %s43, 1
          %s165 = smul.addr %s164, 256
          %s166 = scalar_lea.vmem [#allocation2], %s165
          %s167 = smul.u32 32, %s19
          %s168 = smul.u32 2, %s21
          %s169 = smul.addr %s167, 4
          %s170 = sadd.s32 %s168, %s169
          %s171 = smul.addr %s170, 4
          %s172 = scalar_lea.vmem %s0, %s171
          // Predicated region
          $region21: #{mpconv_forward.1} parent=19 // pred_check
            _
          $region22: #{mpconv_forward.1} parent=19 // pred_check_branch
            %174 = sbr.rel (0) target = $region24
          $region23: #{mpconv_forward.1} parent=19 // pred_region
            // Predicated region
            $region25: #{mpconv_forward.1} parent=23 // pred_check
              _
            $region26: #{mpconv_forward.1} parent=23 // pred_check_branch
              %176 = sbr.rel (0) target = $region28
            $region27: #{mpconv_forward.1} parent=23 // pred_region
              // Predicated region
              $region40: #{mpconv_forward.1} parent=27 // pred_check
                _
              $region41: #{mpconv_forward.1} parent=27 // pred_check_branch
                %254 = sbr.rel (0) target = $region43
              $region42: #{mpconv_forward.1} parent=27 // pred_region
                loop: start=0, step=1, limit=1
                $region44: #{mpconv_forward.1} parent=42 // loop_pre_header
                  _
                $region45: #{mpconv_forward.1} parent=42 // loop_header
                  %s256 = sphi 0, %s260
                  %p257 = scmp.ge.s32.totalorder %s256, 1
                  %s261 = sphi %s172, %s172
                  %s262 = sphi %s166, %s166
                $region46: #{mpconv_forward.1} parent=42 // loop_header_branch
                  %259 = sbr.rel (%p257) target = $region50
                $region47: #{mpconv_forward.1} parent=42 // loop_body
                  %v263 = vld [vmem:[%s261] sm:$0xff]
                  %264 = vst [vmem:[%s262] sm:$0xff] %v263
                  %v265 = vld [vmem:[%s261 + $0x10] sm:$0xff]
                  %266 = vst [vmem:[%s262 + $0x8] sm:$0xff] %v265
                  %v267 = vld [vmem:[%s261 + $0x20] sm:$0xff]
                  %268 = vst [vmem:[%s262 + $0x10] sm:$0xff] %v267
                  %v269 = vld [vmem:[%s261 + $0x30] sm:$0xff]
                  %270 = vst [vmem:[%s262 + $0x18] sm:$0xff] %v269
                  %v271 = vld [vmem:[%s261 + $0x40] sm:$0xff]
                  %272 = vst [vmem:[%s262 + $0x20] sm:$0xff] %v271
                  %v273 = vld [vmem:[%s261 + $0x50] sm:$0xff]
                  %274 = vst [vmem:[%s262 + $0x28] sm:$0xff] %v273
                  %v275 = vld [vmem:[%s261 + $0x60] sm:$0xff]
                  %276 = vst [vmem:[%s262 + $0x30] sm:$0xff] %v275
                  %v277 = vld [vmem:[%s261 + $0x70] sm:$0xff]
                  %278 = vst [vmem:[%s262 + $0x38] sm:$0xff] %v277
                  %v279 = vld [vmem:[%s261 + $0x80] sm:$0xff]
                  %280 = vst [vmem:[%s262 + $0x40] sm:$0xff] %v279
                  %v281 = vld [vmem:[%s261 + $0x90] sm:$0xff]
                  %282 = vst [vmem:[%s262 + $0x48] sm:$0xff] %v281
                  %v283 = vld [vmem:[%s261 + $0xa0] sm:$0xff]
                  %284 = vst [vmem:[%s262 + $0x50] sm:$0xff] %v283
                  %v285 = vld [vmem:[%s261 + $0xb0] sm:$0xff]
                  %286 = vst [vmem:[%s262 + $0x58] sm:$0xff] %v285
                  %v287 = vld [vmem:[%s261 + $0xc0] sm:$0xff]
                  %288 = vst [vmem:[%s262 + $0x60] sm:$0xff] %v287
                  %v289 = vld [vmem:[%s261 + $0xd0] sm:$0xff]
                  %290 = vst [vmem:[%s262 + $0x68] sm:$0xff] %v289
                  %v291 = vld [vmem:[%s261 + $0xe0] sm:$0xff]
                  %292 = vst [vmem:[%s262 + $0x70] sm:$0xff] %v291
                  %v293 = vld [vmem:[%s261 + $0xf0] sm:$0xff]
                  %294 = vst [vmem:[%s262 + $0x78] sm:$0xff] %v293
                  %v295 = vld [vmem:[%s261 + $0x100] sm:$0xff]
                  %296 = vst [vmem:[%s262 + $0x80] sm:$0xff] %v295
                  %v297 = vld [vmem:[%s261 + $0x110] sm:$0xff]
                  %298 = vst [vmem:[%s262 + $0x88] sm:$0xff] %v297
                  %v299 = vld [vmem:[%s261 + $0x120] sm:$0xff]
                  %300 = vst [vmem:[%s262 + $0x90] sm:$0xff] %v299
                  %v301 = vld [vmem:[%s261 + $0x130] sm:$0xff]
                  %302 = vst [vmem:[%s262 + $0x98] sm:$0xff] %v301
                  %v303 = vld [vmem:[%s261 + $0x140] sm:$0xff]
                  %304 = vst [vmem:[%s262 + $0xa0] sm:$0xff] %v303
                  %v305 = vld [vmem:[%s261 + $0x150] sm:$0xff]
                  %306 = vst [vmem:[%s262 + $0xa8] sm:$0xff] %v305
                  %v307 = vld [vmem:[%s261 + $0x160] sm:$0xff]
                  %308 = vst [vmem:[%s262 + $0xb0] sm:$0xff] %v307
                  %v309 = vld [vmem:[%s261 + $0x170] sm:$0xff]
                  %310 = vst [vmem:[%s262 + $0xb8] sm:$0xff] %v309
                  %v311 = vld [vmem:[%s261 + $0x180] sm:$0xff]
                  %312 = vst [vmem:[%s262 + $0xc0] sm:$0xff] %v311
                  %v313 = vld [vmem:[%s261 + $0x190] sm:$0xff]
                  %314 = vst [vmem:[%s262 + $0xc8] sm:$0xff] %v313
                  %v315 = vld [vmem:[%s261 + $0x1a0] sm:$0xff]
                  %316 = vst [vmem:[%s262 + $0xd0] sm:$0xff] %v315
                  %v317 = vld [vmem:[%s261 + $0x1b0] sm:$0xff]
                  %318 = vst [vmem:[%s262 + $0xd8] sm:$0xff] %v317
                  %v319 = vld [vmem:[%s261 + $0x1c0] sm:$0xff]
                  %320 = vst [vmem:[%s262 + $0xe0] sm:$0xff] %v319
                  %v321 = vld [vmem:[%s261 + $0x1d0] sm:$0xff]
                  %322 = vst [vmem:[%s262 + $0xe8] sm:$0xff] %v321
                  %v323 = vld [vmem:[%s261 + $0x1e0] sm:$0xff]
                  %324 = vst [vmem:[%s262 + $0xf0] sm:$0xff] %v323
                  %v325 = vld [vmem:[%s261 + $0x1f0] sm:$0xff]
                  %326 = vst [vmem:[%s262 + $0xf8] sm:$0xff] %v325
                $region48: #{mpconv_forward.1} parent=42 // loop_footer
                  %s260 = sadd.s32 1, %s256
                $region49: #{mpconv_forward.1} parent=42 // loop_footer_branch
                  %255 = sbr.rel target = $region45
                $region50: #{mpconv_forward.1} parent=42 // loop_exit
                  _
              $region43: #{mpconv_forward.1} parent=27 // pred_fallthru
                _
              // Predicated region
              $region51: #{mpconv_forward.1} parent=27 // pred_check
                _
              $region52: #{mpconv_forward.1} parent=27 // pred_check_branch
                %328 = sbr.rel target = $region54
              $region53: #{mpconv_forward.1} parent=27 // pred_region
                _
              $region54: #{mpconv_forward.1} parent=27 // pred_fallthru
                _
            $region28: #{mpconv_forward.1} parent=23 // pred_fallthru
              _
            // Predicated region
            $region29: #{mpconv_forward.1} parent=23 // pred_check
              _
            $region30: #{mpconv_forward.1} parent=23 // pred_check_branch
              %178 = sbr.rel target = $region32
            $region31: #{mpconv_forward.1} parent=23 // pred_region
              %s180 = ssub.s32 256, 1
              loop: start=0, step=1, limit=1
              $region33: #{mpconv_forward.1} parent=31 // loop_pre_header
                _
              $region34: #{mpconv_forward.1} parent=31 // loop_header
                %s182 = sphi 0, %s186
                %p183 = scmp.ge.s32.totalorder %s182, 1
                %s187 = sphi %s172, %s172
                %s188 = sphi %s166, %s166
              $region35: #{mpconv_forward.1} parent=31 // loop_header_branch
                %185 = sbr.rel (%p183) target = $region39
              $region36: #{mpconv_forward.1} parent=31 // loop_body
                %v189 = vld [vmem:[%s187] sm:%s180]
                %190 = vst [vmem:[%s188] sm:%s180] %v189
                %v191 = vld [vmem:[%s187 + $0x10] sm:%s180]
                %192 = vst [vmem:[%s188 + $0x8] sm:%s180] %v191
                %v193 = vld [vmem:[%s187 + $0x20] sm:%s180]
                %194 = vst [vmem:[%s188 + $0x10] sm:%s180] %v193
                %v195 = vld [vmem:[%s187 + $0x30] sm:%s180]
                %196 = vst [vmem:[%s188 + $0x18] sm:%s180] %v195
                %v197 = vld [vmem:[%s187 + $0x40] sm:%s180]
                %198 = vst [vmem:[%s188 + $0x20] sm:%s180] %v197
                %v199 = vld [vmem:[%s187 + $0x50] sm:%s180]
                %200 = vst [vmem:[%s188 + $0x28] sm:%s180] %v199
                %v201 = vld [vmem:[%s187 + $0x60] sm:%s180]
                %202 = vst [vmem:[%s188 + $0x30] sm:%s180] %v201
                %v203 = vld [vmem:[%s187 + $0x70] sm:%s180]
                %204 = vst [vmem:[%s188 + $0x38] sm:%s180] %v203
                %v205 = vld [vmem:[%s187 + $0x80] sm:%s180]
                %206 = vst [vmem:[%s188 + $0x40] sm:%s180] %v205
                %v207 = vld [vmem:[%s187 + $0x90] sm:%s180]
                %208 = vst [vmem:[%s188 + $0x48] sm:%s180] %v207
                %v209 = vld [vmem:[%s187 + $0xa0] sm:%s180]
                %210 = vst [vmem:[%s188 + $0x50] sm:%s180] %v209
                %v211 = vld [vmem:[%s187 + $0xb0] sm:%s180]
                %212 = vst [vmem:[%s188 + $0x58] sm:%s180] %v211
                %v213 = vld [vmem:[%s187 + $0xc0] sm:%s180]
                %214 = vst [vmem:[%s188 + $0x60] sm:%s180] %v213
                %v215 = vld [vmem:[%s187 + $0xd0] sm:%s180]
                %216 = vst [vmem:[%s188 + $0x68] sm:%s180] %v215
                %v217 = vld [vmem:[%s187 + $0xe0] sm:%s180]
                %218 = vst [vmem:[%s188 + $0x70] sm:%s180] %v217
                %v219 = vld [vmem:[%s187 + $0xf0] sm:%s180]
                %220 = vst [vmem:[%s188 + $0x78] sm:%s180] %v219
                %v221 = vld [vmem:[%s187 + $0x100] sm:%s180]
                %222 = vst [vmem:[%s188 + $0x80] sm:%s180] %v221
                %v223 = vld [vmem:[%s187 + $0x110] sm:%s180]
                %224 = vst [vmem:[%s188 + $0x88] sm:%s180] %v223
                %v225 = vld [vmem:[%s187 + $0x120] sm:%s180]
                %226 = vst [vmem:[%s188 + $0x90] sm:%s180] %v225
                %v227 = vld [vmem:[%s187 + $0x130] sm:%s180]
                %228 = vst [vmem:[%s188 + $0x98] sm:%s180] %v227
                %v229 = vld [vmem:[%s187 + $0x140] sm:%s180]
                %230 = vst [vmem:[%s188 + $0xa0] sm:%s180] %v229
                %v231 = vld [vmem:[%s187 + $0x150] sm:%s180]
                %232 = vst [vmem:[%s188 + $0xa8] sm:%s180] %v231
                %v233 = vld [vmem:[%s187 + $0x160] sm:%s180]
                %234 = vst [vmem:[%s188 + $0xb0] sm:%s180] %v233
                %v235 = vld [vmem:[%s187 + $0x170] sm:%s180]
                %236 = vst [vmem:[%s188 + $0xb8] sm:%s180] %v235
                %v237 = vld [vmem:[%s187 + $0x180] sm:%s180]
                %238 = vst [vmem:[%s188 + $0xc0] sm:%s180] %v237
                %v239 = vld [vmem:[%s187 + $0x190] sm:%s180]
                %240 = vst [vmem:[%s188 + $0xc8] sm:%s180] %v239
                %v241 = vld [vmem:[%s187 + $0x1a0] sm:%s180]
                %242 = vst [vmem:[%s188 + $0xd0] sm:%s180] %v241
                %v243 = vld [vmem:[%s187 + $0x1b0] sm:%s180]
                %244 = vst [vmem:[%s188 + $0xd8] sm:%s180] %v243
                %v245 = vld [vmem:[%s187 + $0x1c0] sm:%s180]
                %246 = vst [vmem:[%s188 + $0xe0] sm:%s180] %v245
                %v247 = vld [vmem:[%s187 + $0x1d0] sm:%s180]
                %248 = vst [vmem:[%s188 + $0xe8] sm:%s180] %v247
                %v249 = vld [vmem:[%s187 + $0x1e0] sm:%s180]
                %250 = vst [vmem:[%s188 + $0xf0] sm:%s180] %v249
                %v251 = vld [vmem:[%s187 + $0x1f0] sm:%s180]
                %252 = vst [vmem:[%s188 + $0xf8] sm:%s180] %v251
              $region37: #{mpconv_forward.1} parent=31 // loop_footer
                %s186 = sadd.s32 1, %s182
              $region38: #{mpconv_forward.1} parent=31 // loop_footer_branch
                %181 = sbr.rel target = $region34
              $region39: #{mpconv_forward.1} parent=31 // loop_exit
                _
            $region32: #{mpconv_forward.1} parent=23 // pred_fallthru
              _
          $region24: #{mpconv_forward.1} parent=19 // pred_fallthru
            _
          %329 = vnop
        $region20: #{mpconv_forward.1} parent=15 // pred_fallthru
          _
        // Predicated region
        $region55: #{mpconv_forward.1} parent=15 // pred_check
          %p330 = pneg %p81
        $region56: #{mpconv_forward.1} parent=15 // pred_check_branch
          %332 = sbr.rel (%p330) target = $region58
        $region57: #{mpconv_forward.1} parent=15 // pred_region
          %s333 = smul.u32 32, %s21
          %s334 = smul.u32 2, %s20
          %p335 = scmp.lt.s32.totalorder %s333, 63
          %s336 = scalar_select %p335, %s333, 63
          %p337 = scmp.lt.s32.totalorder %s334, 1
          %s338 = scalar_select %p337, %s334, 1
          %s339 = smul.addr %s336, 2
          %s340 = sadd.s32 %s338, %s339
          %s341 = smul.addr %s340, 4
          %s342 = scalar_lea.vmem %s1, %s341
          %s343 = smul.u32 32, %s21
          %s344 = smul.u32 2, %s20
        $region58: #{mpconv_forward.1} parent=15 // pred_fallthru
          _
        // Predicated region
        $region59: #{mpconv_forward.1} parent=15 // pred_check
          %p345 = pneg %p107
        $region60: #{mpconv_forward.1} parent=15 // pred_check_branch
          %347 = sbr.rel (%p345) target = $region62
        $region61: #{mpconv_forward.1} parent=15 // pred_region
          %s348 = smul.u32 32, %s19
          %p349 = scmp.lt.s32.totalorder %s348, 63
          %s350 = scalar_select %p349, %s348, 63
          %s351 = smul.addr %s350, 8
          %s352 = scalar_lea.vmem %s2, %s351
          %s353 = smul.u32 32, %s19
        $region62: #{mpconv_forward.1} parent=15 // pred_fallthru
          _
      $region16: #{mpconv_forward.1} parent=5 // pred_fallthru
        _
      %p354 = scmp.le.s32.totalorder 1, %s12
      %p355 = scmp.lt.s32.totalorder %s12, 5
      %p356 = pnand %p354, %p355
      %p357 = pneg %p356
      // Predicated region
      $region63: #{mpconv_forward.1} parent=5 // pred_check
        _
      $region64: #{mpconv_forward.1} parent=5 // pred_check_branch
        %359 = sbr.rel (%p356) target = $region66
      $region65: #{mpconv_forward.1} parent=5 // pred_region
        %s360 = ssub.s32 %s12, 1
        %s361 = sand.u32 %s46, 1
        %s362 = sand.u32 %s46, 1
        %s363 = smul.addr %s362, 256
        %s364 = scalar_lea.vmem [#allocation2], %s363
        // Predicated region
        $region67: #{mpconv_forward.1} parent=65 // pred_check
          %p365 = pneg %p59
        $region68: #{mpconv_forward.1} parent=65 // pred_check_branch
          %367 = sbr.rel (%p365) target = $region70
        $region69: #{mpconv_forward.1} parent=65 // pred_region
          _
        $region70: #{mpconv_forward.1} parent=65 // pred_fallthru
          _
        %s368 = sand.u32 %s46, 1
        %s369 = sand.u32 %s46, 1
        %s370 = smul.addr %s369, 256
        %s371 = scalar_lea.vmem [#allocation2], %s370
        %p372 = pneg %p59
        %p373 = pneg %p56
        %s374 = smul.u32 32, %s24
        %s375 = smul.u32 2, %s23
        %p376 = scmp.lt.s32.totalorder %s374, 63
        %s377 = scalar_select %p376, %s374, 63
        %p378 = scmp.lt.s32.totalorder %s375, 1
        %s379 = scalar_select %p378, %s375, 1
        %s380 = smul.addr %s377, 2
        %s381 = sadd.s32 %s379, %s380
        %s382 = smul.addr %s381, 4
        %s383 = scalar_lea.vmem %s1, %s382
        %p384 = pneg %p87
        %p385 = pneg %p84
        %s386 = smul.u32 32, %s22
        %p387 = scmp.lt.s32.totalorder %s386, 63
        %s388 = scalar_select %p387, %s386, 63
        %s389 = smul.addr %s388, 8
        %s390 = scalar_lea.vmem %s2, %s389
        %p391 = pneg %p113
        %p392 = pneg %p110
        %p393 = pneg %p141
        %p394 = pneg %p138
        %s395 = sand.u32 %s128, 1
        %s396 = scalar_lea.sflag [#allocation4], %s395
        %s397 = sand.u32 %s128, 1
        %s398 = smul.addr %s397, 512
        %s399 = scalar_lea.vmem [#allocation3], %s398
        %s400 = smul.u32 32, %s22
        %s401 = smul.u32 2, %s24
        %s402 = smul.u32 32, %s24
        %s403 = smul.u32 2, %s23
        %p404 = scmp.lt.s32.totalorder %s402, 63
        %s405 = scalar_select %p404, %s402, 63
        %p406 = scmp.lt.s32.totalorder %s403, 1
        %s407 = scalar_select %p406, %s403, 1
        %s408 = smul.addr %s405, 2
        %s409 = sadd.s32 %s407, %s408
        %s410 = smul.addr %s409, 4
        %s411 = scalar_lea.vmem %s1, %s410
        %s412 = smul.u32 32, %s24
        %s413 = smul.u32 2, %s23
        %s414 = smul.u32 32, %s22
        %p415 = scmp.lt.s32.totalorder %s414, 63
        %s416 = scalar_select %p415, %s414, 63
        %s417 = smul.addr %s416, 8
        %s418 = scalar_lea.vmem %s2, %s417
        %s419 = smul.u32 32, %s22
        %s420 = smul.u32 32, %s22
        %s421 = smul.u32 2, %s23
        %v422 = vld [vmem:[%s364] sm:$0xff]
        %v423 = vld [vmem:[%s364 + $0x8] sm:$0xff]
        %v424 = vld [vmem:[%s364 + $0x10] sm:$0xff]
        %v425 = vld [vmem:[%s364 + $0x18] sm:$0xff]
        %v426 = vld [vmem:[%s364 + $0x20] sm:$0xff]
        %v427 = vld [vmem:[%s364 + $0x28] sm:$0xff]
        %v428 = vld [vmem:[%s364 + $0x30] sm:$0xff]
        %v429 = vld [vmem:[%s364 + $0x38] sm:$0xff]
        %v430 = vld [vmem:[%s364 + $0x40] sm:$0xff]
        %v431 = vld [vmem:[%s364 + $0x48] sm:$0xff]
        %v432 = vld [vmem:[%s364 + $0x50] sm:$0xff]
        %v433 = vld [vmem:[%s364 + $0x58] sm:$0xff]
        %v434 = vld [vmem:[%s364 + $0x60] sm:$0xff]
        %v435 = vld [vmem:[%s364 + $0x68] sm:$0xff]
        %v436 = vld [vmem:[%s364 + $0x70] sm:$0xff]
        %v437 = vld [vmem:[%s364 + $0x78] sm:$0xff]
        %v438 = vld [vmem:[%s364 + $0x80] sm:$0xff]
        %v439 = vld [vmem:[%s364 + $0x88] sm:$0xff]
        %v440 = vld [vmem:[%s364 + $0x90] sm:$0xff]
        %v441 = vld [vmem:[%s364 + $0x98] sm:$0xff]
        %v442 = vld [vmem:[%s364 + $0xa0] sm:$0xff]
        %v443 = vld [vmem:[%s364 + $0xa8] sm:$0xff]
        %v444 = vld [vmem:[%s364 + $0xb0] sm:$0xff]
        %v445 = vld [vmem:[%s364 + $0xb8] sm:$0xff]
        %v446 = vld [vmem:[%s364 + $0xc0] sm:$0xff]
        %v447 = vld [vmem:[%s364 + $0xc8] sm:$0xff]
        %v448 = vld [vmem:[%s364 + $0xd0] sm:$0xff]
        %v449 = vld [vmem:[%s364 + $0xd8] sm:$0xff]
        %v450 = vld [vmem:[%s364 + $0xe0] sm:$0xff]
        %v451 = vld [vmem:[%s364 + $0xe8] sm:$0xff]
        %v452 = vld [vmem:[%s364 + $0xf0] sm:$0xff]
        %v453 = vld [vmem:[%s364 + $0xf8] sm:$0xff]
        %v454 = vld [vmem:[%s411] sm:$0xff]
        %v455 = vld [vmem:[%s411 + $0x8] sm:$0xff]
        %v456 = vld [vmem:[%s411 + $0x10] sm:$0xff]
        %v457 = vld [vmem:[%s411 + $0x18] sm:$0xff]
        %v458 = vld [vmem:[%s411 + $0x20] sm:$0xff]
        %v459 = vld [vmem:[%s411 + $0x28] sm:$0xff]
        %v460 = vld [vmem:[%s411 + $0x30] sm:$0xff]
        %v461 = vld [vmem:[%s411 + $0x38] sm:$0xff]
        %v462 = vld [vmem:[%s411 + $0x40] sm:$0xff]
        %v463 = vld [vmem:[%s411 + $0x48] sm:$0xff]
        %v464 = vld [vmem:[%s411 + $0x50] sm:$0xff]
        %v465 = vld [vmem:[%s411 + $0x58] sm:$0xff]
        %v466 = vld [vmem:[%s411 + $0x60] sm:$0xff]
        %v467 = vld [vmem:[%s411 + $0x68] sm:$0xff]
        %v468 = vld [vmem:[%s411 + $0x70] sm:$0xff]
        %v469 = vld [vmem:[%s411 + $0x78] sm:$0xff]
        %v470 = vld [vmem:[%s411 + $0x80] sm:$0xff]
        %v471 = vld [vmem:[%s411 + $0x88] sm:$0xff]
        %v472 = vld [vmem:[%s411 + $0x90] sm:$0xff]
        %v473 = vld [vmem:[%s411 + $0x98] sm:$0xff]
        %v474 = vld [vmem:[%s411 + $0xa0] sm:$0xff]
        %v475 = vld [vmem:[%s411 + $0xa8] sm:$0xff]
        %v476 = vld [vmem:[%s411 + $0xb0] sm:$0xff]
        %v477 = vld [vmem:[%s411 + $0xb8] sm:$0xff]
        %v478 = vld [vmem:[%s411 + $0xc0] sm:$0xff]
        %v479 = vld [vmem:[%s411 + $0xc8] sm:$0xff]
        %v480 = vld [vmem:[%s411 + $0xd0] sm:$0xff]
        %v481 = vld [vmem:[%s411 + $0xd8] sm:$0xff]
        %v482 = vld [vmem:[%s411 + $0xe0] sm:$0xff]
        %v483 = vld [vmem:[%s411 + $0xe8] sm:$0xff]
        %v484 = vld [vmem:[%s411 + $0xf0] sm:$0xff]
        %v485 = vld [vmem:[%s411 + $0xf8] sm:$0xff]
        %v518 = vunpack.c.l.b16 %v422
        %v519 = vunpack.c.h.b16 %v422
        %v520 = vunpack.c.l.b16 %v423
        %v521 = vunpack.c.h.b16 %v423
        %v522 = vunpack.c.l.b16 %v424
        %v523 = vunpack.c.h.b16 %v424
        %v524 = vunpack.c.l.b16 %v425
        %v525 = vunpack.c.h.b16 %v425
        %v526 = vunpack.c.l.b16 %v426
        %v527 = vunpack.c.h.b16 %v426
        %v528 = vunpack.c.l.b16 %v427
        %v529 = vunpack.c.h.b16 %v427
        %v530 = vunpack.c.l.b16 %v428
        %v531 = vunpack.c.h.b16 %v428
        %v532 = vunpack.c.l.b16 %v429
        %v533 = vunpack.c.h.b16 %v429
        %v534 = vunpack.c.l.b16 %v430
        %v535 = vunpack.c.h.b16 %v430
        %v536 = vunpack.c.l.b16 %v431
        %v537 = vunpack.c.h.b16 %v431
        %v538 = vunpack.c.l.b16 %v432
        %v539 = vunpack.c.h.b16 %v432
        %v540 = vunpack.c.l.b16 %v433
        %v541 = vunpack.c.h.b16 %v433
        %v542 = vunpack.c.l.b16 %v434
        %v543 = vunpack.c.h.b16 %v434
        %v544 = vunpack.c.l.b16 %v435
        %v545 = vunpack.c.h.b16 %v435
        %v546 = vunpack.c.l.b16 %v436
        %v547 = vunpack.c.h.b16 %v436
        %v548 = vunpack.c.l.b16 %v437
        %v549 = vunpack.c.h.b16 %v437
        %v550 = vunpack.c.l.b16 %v438
        %v551 = vunpack.c.h.b16 %v438
        %v552 = vunpack.c.l.b16 %v439
        %v553 = vunpack.c.h.b16 %v439
        %v554 = vunpack.c.l.b16 %v440
        %v555 = vunpack.c.h.b16 %v440
        %v556 = vunpack.c.l.b16 %v441
        %v557 = vunpack.c.h.b16 %v441
        %v558 = vunpack.c.l.b16 %v442
        %v559 = vunpack.c.h.b16 %v442
        %v560 = vunpack.c.l.b16 %v443
        %v561 = vunpack.c.h.b16 %v443
        %v562 = vunpack.c.l.b16 %v444
        %v563 = vunpack.c.h.b16 %v444
        %v564 = vunpack.c.l.b16 %v445
        %v565 = vunpack.c.h.b16 %v445
        %v566 = vunpack.c.l.b16 %v446
        %v567 = vunpack.c.h.b16 %v446
        %v568 = vunpack.c.l.b16 %v447
        %v569 = vunpack.c.h.b16 %v447
        %v570 = vunpack.c.l.b16 %v448
        %v571 = vunpack.c.h.b16 %v448
        %v572 = vunpack.c.l.b16 %v449
        %v573 = vunpack.c.h.b16 %v449
        %v574 = vunpack.c.l.b16 %v450
        %v575 = vunpack.c.h.b16 %v450
        %v576 = vunpack.c.l.b16 %v451
        %v577 = vunpack.c.h.b16 %v451
        %v578 = vunpack.c.l.b16 %v452
        %v579 = vunpack.c.h.b16 %v452
        %v580 = vunpack.c.l.b16 %v453
        %v581 = vunpack.c.h.b16 %v453
        %v582 = vpack.c.b16 %v520, %v518
        %v583 = vpack.c.b16 %v521, %v519
        %v584 = vpack.c.b16 %v524, %v522
        %v585 = vpack.c.b16 %v525, %v523
        %v586 = vpack.c.b16 %v528, %v526
        %v587 = vpack.c.b16 %v529, %v527
        %v588 = vpack.c.b16 %v532, %v530
        %v589 = vpack.c.b16 %v533, %v531
        %v590 = vpack.c.b16 %v536, %v534
        %v591 = vpack.c.b16 %v537, %v535
        %v592 = vpack.c.b16 %v540, %v538
        %v593 = vpack.c.b16 %v541, %v539
        %v594 = vpack.c.b16 %v544, %v542
        %v595 = vpack.c.b16 %v545, %v543
        %v596 = vpack.c.b16 %v548, %v546
        %v597 = vpack.c.b16 %v549, %v547
        %v598 = vpack.c.b16 %v552, %v550
        %v599 = vpack.c.b16 %v553, %v551
        %v600 = vpack.c.b16 %v556, %v554
        %v601 = vpack.c.b16 %v557, %v555
        %v602 = vpack.c.b16 %v560, %v558
        %v603 = vpack.c.b16 %v561, %v559
        %v604 = vpack.c.b16 %v564, %v562
        %v605 = vpack.c.b16 %v565, %v563
        %v606 = vpack.c.b16 %v568, %v566
        %v607 = vpack.c.b16 %v569, %v567
        %v608 = vpack.c.b16 %v572, %v570
        %v609 = vpack.c.b16 %v573, %v571
        %v610 = vpack.c.b16 %v576, %v574
        %v611 = vpack.c.b16 %v577, %v575
        %v612 = vpack.c.b16 %v580, %v578
        %v613 = vpack.c.b16 %v581, %v579
        %v678 = vunpack.c.l.b16 %v454
        %v679 = vunpack.c.h.b16 %v454
        %v680 = vunpack.c.l.b16 %v455
        %v681 = vunpack.c.h.b16 %v455
        %v682 = vunpack.c.l.b16 %v456
        %v683 = vunpack.c.h.b16 %v456
        %v684 = vunpack.c.l.b16 %v457
        %v685 = vunpack.c.h.b16 %v457
        %v686 = vunpack.c.l.b16 %v458
        %v687 = vunpack.c.h.b16 %v458
        %v688 = vunpack.c.l.b16 %v459
        %v689 = vunpack.c.h.b16 %v459
        %v690 = vunpack.c.l.b16 %v460
        %v691 = vunpack.c.h.b16 %v460
        %v692 = vunpack.c.l.b16 %v461
        %v693 = vunpack.c.h.b16 %v461
        %v694 = vunpack.c.l.b16 %v462
        %v695 = vunpack.c.h.b16 %v462
        %v696 = vunpack.c.l.b16 %v463
        %v697 = vunpack.c.h.b16 %v463
        %v698 = vunpack.c.l.b16 %v464
        %v699 = vunpack.c.h.b16 %v464
        %v700 = vunpack.c.l.b16 %v465
        %v701 = vunpack.c.h.b16 %v465
        %v702 = vunpack.c.l.b16 %v466
        %v703 = vunpack.c.h.b16 %v466
        %v704 = vunpack.c.l.b16 %v467
        %v705 = vunpack.c.h.b16 %v467
        %v706 = vunpack.c.l.b16 %v468
        %v707 = vunpack.c.h.b16 %v468
        %v708 = vunpack.c.l.b16 %v469
        %v709 = vunpack.c.h.b16 %v469
        %v710 = vunpack.c.l.b16 %v470
        %v711 = vunpack.c.h.b16 %v470
        %v712 = vunpack.c.l.b16 %v471
        %v713 = vunpack.c.h.b16 %v471
        %v714 = vunpack.c.l.b16 %v472
        %v715 = vunpack.c.h.b16 %v472
        %v716 = vunpack.c.l.b16 %v473
        %v717 = vunpack.c.h.b16 %v473
        %v718 = vunpack.c.l.b16 %v474
        %v719 = vunpack.c.h.b16 %v474
        %v720 = vunpack.c.l.b16 %v475
        %v721 = vunpack.c.h.b16 %v475
        %v722 = vunpack.c.l.b16 %v476
        %v723 = vunpack.c.h.b16 %v476
        %v724 = vunpack.c.l.b16 %v477
        %v725 = vunpack.c.h.b16 %v477
        %v726 = vunpack.c.l.b16 %v478
        %v727 = vunpack.c.h.b16 %v478
        %v728 = vunpack.c.l.b16 %v479
        %v729 = vunpack.c.h.b16 %v479
        %v730 = vunpack.c.l.b16 %v480
        %v731 = vunpack.c.h.b16 %v480
        %v732 = vunpack.c.l.b16 %v481
        %v733 = vunpack.c.h.b16 %v481
        %v734 = vunpack.c.l.b16 %v482
        %v735 = vunpack.c.h.b16 %v482
        %v736 = vunpack.c.l.b16 %v483
        %v737 = vunpack.c.h.b16 %v483
        %v738 = vunpack.c.l.b16 %v484
        %v739 = vunpack.c.h.b16 %v484
        %v740 = vunpack.c.l.b16 %v485
        %v741 = vunpack.c.h.b16 %v485
        %v742 = vpack.c.b16 %v680, %v678
        %v743 = vpack.c.b16 %v681, %v679
        %v744 = vpack.c.b16 %v684, %v682
        %v745 = vpack.c.b16 %v685, %v683
        %v746 = vpack.c.b16 %v688, %v686
        %v747 = vpack.c.b16 %v689, %v687
        %v748 = vpack.c.b16 %v692, %v690
        %v749 = vpack.c.b16 %v693, %v691
        %v750 = vpack.c.b16 %v696, %v694
        %v751 = vpack.c.b16 %v697, %v695
        %v752 = vpack.c.b16 %v700, %v698
        %v753 = vpack.c.b16 %v701, %v699
        %v754 = vpack.c.b16 %v704, %v702
        %v755 = vpack.c.b16 %v705, %v703
        %v756 = vpack.c.b16 %v708, %v706
        %v757 = vpack.c.b16 %v709, %v707
        %v758 = vpack.c.b16 %v712, %v710
        %v759 = vpack.c.b16 %v713, %v711
        %v760 = vpack.c.b16 %v716, %v714
        %v761 = vpack.c.b16 %v717, %v715
        %v762 = vpack.c.b16 %v720, %v718
        %v763 = vpack.c.b16 %v721, %v719
        %v764 = vpack.c.b16 %v724, %v722
        %v765 = vpack.c.b16 %v725, %v723
        %v766 = vpack.c.b16 %v728, %v726
        %v767 = vpack.c.b16 %v729, %v727
        %v768 = vpack.c.b16 %v732, %v730
        %v769 = vpack.c.b16 %v733, %v731
        %v770 = vpack.c.b16 %v736, %v734
        %v771 = vpack.c.b16 %v737, %v735
        %v772 = vpack.c.b16 %v740, %v738
        %v773 = vpack.c.b16 %v741, %v739
        %806 = vmatprep.subr.bf16.mxu0 %v757
        %807 = vmatpush1.bf16.msra.mxu0 %v756
        %808 = vmatprep.subr.bf16.mxu0 %v755
        %809 = vmatpush1.bf16.msra.mxu0 %v754
        %810 = vmatprep.subr.bf16.mxu0 %v753
        %811 = vmatpush1.bf16.msra.mxu0 %v752
        %812 = vmatprep.subr.bf16.mxu0 %v751
        %813 = vmatpush1.bf16.msra.mxu0 %v750
        %814 = vmatprep.subr.bf16.mxu0 %v749
        %815 = vmatpush1.bf16.msra.mxu0 %v748
        %816 = vmatprep.subr.bf16.mxu0 %v747
        %817 = vmatpush1.bf16.msra.mxu0 %v746
        %818 = vmatprep.subr.bf16.mxu0 %v745
        %819 = vmatpush1.bf16.msra.mxu0 %v744
        %820 = vmatprep.subr.bf16.mxu0 %v743
        %821 = vmatpush1.bf16.msra.mxu0 %v742
        %822 = vmatprep.subr.bf16.mxu0 %v773
        %823 = vmatpush2.bf16.msra.mxu0 %v772
        %824 = vmatprep.subr.bf16.mxu0 %v771
        %825 = vmatpush2.bf16.msra.mxu0 %v770
        %826 = vmatprep.subr.bf16.mxu0 %v769
        %827 = vmatpush2.bf16.msra.mxu0 %v768
        %828 = vmatprep.subr.bf16.mxu0 %v767
        %829 = vmatpush2.bf16.msra.mxu0 %v766
        %830 = vmatprep.subr.bf16.mxu0 %v765
        %831 = vmatpush2.bf16.msra.mxu0 %v764
        %832 = vmatprep.subr.bf16.mxu0 %v763
        %833 = vmatpush2.bf16.msra.mxu0 %v762
        %834 = vmatprep.subr.bf16.mxu0 %v761
        %835 = vmatpush2.bf16.msra.mxu0 %v760
        %836 = vmatprep.subr.bf16.mxu0 %v759
        %837 = vmatpush2.bf16.msra.mxu0 %v758
        %838 = vmatprep.mubr.bf16.mxu0 %v583
        %839 = vmatmul.mubr.bf16.gmra.mxu0 %v582
        %v840 = vpop.f32.mrf.mxu0
        %v841 = vadd.f32 0.0, %v840
        %v842 = vpop.f32.mrf.mxu0
        %v843 = vadd.f32 0.0, %v842
        %v844 = vpop.f32.mrf.mxu0
        %v845 = vadd.f32 0.0, %v844
        %v846 = vpop.f32.mrf.mxu0
        %v847 = vadd.f32 0.0, %v846
        %848 = vmatprep.mubr.bf16.mxu0 %v585
        %849 = vmatmul.mubr.bf16.gmra.mxu0 %v584
        %v850 = vpop.f32.mrf.mxu0
        %v851 = vadd.f32 0.0, %v850
        %v852 = vpop.f32.mrf.mxu0
        %v853 = vadd.f32 0.0, %v852
        %v854 = vpop.f32.mrf.mxu0
        %v855 = vadd.f32 0.0, %v854
        %v856 = vpop.f32.mrf.mxu0
        %v857 = vadd.f32 0.0, %v856
        %858 = vmatprep.mubr.bf16.mxu0 %v587
        %859 = vmatmul.mubr.bf16.gmra.mxu0 %v586
        %v860 = vpop.f32.mrf.mxu0
        %v861 = vadd.f32 0.0, %v860
        %v862 = vpop.f32.mrf.mxu0
        %v863 = vadd.f32 0.0, %v862
        %v864 = vpop.f32.mrf.mxu0
        %v865 = vadd.f32 0.0, %v864
        %v866 = vpop.f32.mrf.mxu0
        %v867 = vadd.f32 0.0, %v866
        %868 = vmatprep.mubr.bf16.mxu0 %v589
        %869 = vmatmul.mubr.bf16.gmra.mxu0 %v588
        %v870 = vpop.f32.mrf.mxu0
        %v871 = vadd.f32 0.0, %v870
        %v872 = vpop.f32.mrf.mxu0
        %v873 = vadd.f32 0.0, %v872
        %v874 = vpop.f32.mrf.mxu0
        %v875 = vadd.f32 0.0, %v874
        %v876 = vpop.f32.mrf.mxu0
        %v877 = vadd.f32 0.0, %v876
        %878 = vmatprep.mubr.bf16.mxu0 %v591
        %879 = vmatmul.mubr.bf16.gmra.mxu0 %v590
        %v880 = vpop.f32.mrf.mxu0
        %v881 = vadd.f32 0.0, %v880
        %v882 = vpop.f32.mrf.mxu0
        %v883 = vadd.f32 0.0, %v882
        %v884 = vpop.f32.mrf.mxu0
        %v885 = vadd.f32 0.0, %v884
        %v886 = vpop.f32.mrf.mxu0
        %v887 = vadd.f32 0.0, %v886
        %888 = vmatprep.mubr.bf16.mxu0 %v593
        %889 = vmatmul.mubr.bf16.gmra.mxu0 %v592
        %v890 = vpop.f32.mrf.mxu0
        %v891 = vadd.f32 0.0, %v890
        %v892 = vpop.f32.mrf.mxu0
        %v893 = vadd.f32 0.0, %v892
        %v894 = vpop.f32.mrf.mxu0
        %v895 = vadd.f32 0.0, %v894
        %v896 = vpop.f32.mrf.mxu0
        %v897 = vadd.f32 0.0, %v896
        %898 = vmatprep.mubr.bf16.mxu0 %v595
        %899 = vmatmul.mubr.bf16.gmra.mxu0 %v594
        %v900 = vpop.f32.mrf.mxu0
        %v901 = vadd.f32 0.0, %v900
        %v902 = vpop.f32.mrf.mxu0
        %v903 = vadd.f32 0.0, %v902
        %v904 = vpop.f32.mrf.mxu0
        %v905 = vadd.f32 0.0, %v904
        %v906 = vpop.f32.mrf.mxu0
        %v907 = vadd.f32 0.0, %v906
        %908 = vmatprep.mubr.bf16.mxu0 %v597
        %909 = vmatmul.mubr.bf16.gmra.mxu0 %v596
        %v910 = vpop.f32.mrf.mxu0
        %v911 = vadd.f32 0.0, %v910
        %v912 = vpop.f32.mrf.mxu0
        %v913 = vadd.f32 0.0, %v912
        %v914 = vpop.f32.mrf.mxu0
        %v915 = vadd.f32 0.0, %v914
        %v916 = vpop.f32.mrf.mxu0
        %v917 = vadd.f32 0.0, %v916
        %918 = vmatprep.mubr.bf16.mxu0 %v599
        %919 = vmatmul.mubr.bf16.gmra.mxu0 %v598
        %v920 = vpop.f32.mrf.mxu0
        %v921 = vadd.f32 0.0, %v920
        %v922 = vpop.f32.mrf.mxu0
        %v923 = vadd.f32 0.0, %v922
        %v924 = vpop.f32.mrf.mxu0
        %v925 = vadd.f32 0.0, %v924
        %v926 = vpop.f32.mrf.mxu0
        %v927 = vadd.f32 0.0, %v926
        %928 = vmatprep.mubr.bf16.mxu0 %v601
        %929 = vmatmul.mubr.bf16.gmra.mxu0 %v600
        %v930 = vpop.f32.mrf.mxu0
        %v931 = vadd.f32 0.0, %v930
        %v932 = vpop.f32.mrf.mxu0
        %v933 = vadd.f32 0.0, %v932
        %v934 = vpop.f32.mrf.mxu0
        %v935 = vadd.f32 0.0, %v934
        %v936 = vpop.f32.mrf.mxu0
        %v937 = vadd.f32 0.0, %v936
        %938 = vmatprep.mubr.bf16.mxu0 %v603
        %939 = vmatmul.mubr.bf16.gmra.mxu0 %v602
        %v940 = vpop.f32.mrf.mxu0
        %v941 = vadd.f32 0.0, %v940
        %v942 = vpop.f32.mrf.mxu0
        %v943 = vadd.f32 0.0, %v942
        %v944 = vpop.f32.mrf.mxu0
        %v945 = vadd.f32 0.0, %v944
        %v946 = vpop.f32.mrf.mxu0
        %v947 = vadd.f32 0.0, %v946
        %948 = vmatprep.mubr.bf16.mxu0 %v605
        %949 = vmatmul.mubr.bf16.gmra.mxu0 %v604
        %v950 = vpop.f32.mrf.mxu0
        %v951 = vadd.f32 0.0, %v950
        %v952 = vpop.f32.mrf.mxu0
        %v953 = vadd.f32 0.0, %v952
        %v954 = vpop.f32.mrf.mxu0
        %v955 = vadd.f32 0.0, %v954
        %v956 = vpop.f32.mrf.mxu0
        %v957 = vadd.f32 0.0, %v956
        %958 = vmatprep.mubr.bf16.mxu0 %v607
        %959 = vmatmul.mubr.bf16.gmra.mxu0 %v606
        %v960 = vpop.f32.mrf.mxu0
        %v961 = vadd.f32 0.0, %v960
        %v962 = vpop.f32.mrf.mxu0
        %v963 = vadd.f32 0.0, %v962
        %v964 = vpop.f32.mrf.mxu0
        %v965 = vadd.f32 0.0, %v964
        %v966 = vpop.f32.mrf.mxu0
        %v967 = vadd.f32 0.0, %v966
        %968 = vmatprep.mubr.bf16.mxu0 %v609
        %969 = vmatmul.mubr.bf16.gmra.mxu0 %v608
        %v970 = vpop.f32.mrf.mxu0
        %v971 = vadd.f32 0.0, %v970
        %v972 = vpop.f32.mrf.mxu0
        %v973 = vadd.f32 0.0, %v972
        %v974 = vpop.f32.mrf.mxu0
        %v975 = vadd.f32 0.0, %v974
        %v976 = vpop.f32.mrf.mxu0
        %v977 = vadd.f32 0.0, %v976
        %978 = vmatprep.mubr.bf16.mxu0 %v611
        %979 = vmatmul.mubr.bf16.gmra.mxu0 %v610
        %v980 = vpop.f32.mrf.mxu0
        %v981 = vadd.f32 0.0, %v980
        %v982 = vpop.f32.mrf.mxu0
        %v983 = vadd.f32 0.0, %v982
        %v984 = vpop.f32.mrf.mxu0
        %v985 = vadd.f32 0.0, %v984
        %v986 = vpop.f32.mrf.mxu0
        %v987 = vadd.f32 0.0, %v986
        %988 = vmatprep.mubr.bf16.mxu0 %v613
        %989 = vmatmul.mubr.bf16.gmra.mxu0 %v612
        %v990 = vpop.f32.mrf.mxu0
        %v991 = vadd.f32 0.0, %v990
        %v992 = vpop.f32.mrf.mxu0
        %v993 = vadd.f32 0.0, %v992
        %v994 = vpop.f32.mrf.mxu0
        %v995 = vadd.f32 0.0, %v994
        %v996 = vpop.f32.mrf.mxu0
        %v997 = vadd.f32 0.0, %v996
        %998 = vdwg.mxu0
        %p999 = scmp.eq.s32.totalorder %s24, 0
        // Predicated region
        $region71: #{mpconv_forward.1} parent=65 // pred_check
          %p1000 = pneg %p999
        $region72: #{mpconv_forward.1} parent=65 // pred_check_branch
          %1002 = sbr.rel (%p1000) target = $region74
        $region73: #{mpconv_forward.1} parent=65 // pred_region
          %1003 = vst [vmem:[%s399] sm:$0xff] %v841
          %1004 = vst [vmem:[%s399 + $0x8] sm:$0xff] %v843
          %1005 = vst [vmem:[%s399 + $0x10] sm:$0xff] %v845
          %1006 = vst [vmem:[%s399 + $0x18] sm:$0xff] %v847
          %1007 = vst [vmem:[%s399 + $0x20] sm:$0xff] %v851
          %1008 = vst [vmem:[%s399 + $0x28] sm:$0xff] %v853
          %1009 = vst [vmem:[%s399 + $0x30] sm:$0xff] %v855
          %1010 = vst [vmem:[%s399 + $0x38] sm:$0xff] %v857
          %1011 = vst [vmem:[%s399 + $0x40] sm:$0xff] %v861
          %1012 = vst [vmem:[%s399 + $0x48] sm:$0xff] %v863
          %1013 = vst [vmem:[%s399 + $0x50] sm:$0xff] %v865
          %1014 = vst [vmem:[%s399 + $0x58] sm:$0xff] %v867
          %1015 = vst [vmem:[%s399 + $0x60] sm:$0xff] %v871
          %1016 = vst [vmem:[%s399 + $0x68] sm:$0xff] %v873
          %1017 = vst [vmem:[%s399 + $0x70] sm:$0xff] %v875
          %1018 = vst [vmem:[%s399 + $0x78] sm:$0xff] %v877
          %1019 = vst [vmem:[%s399 + $0x80] sm:$0xff] %v881
          %1020 = vst [vmem:[%s399 + $0x88] sm:$0xff] %v883
          %1021 = vst [vmem:[%s399 + $0x90] sm:$0xff] %v885
          %1022 = vst [vmem:[%s399 + $0x98] sm:$0xff] %v887
          %1023 = vst [vmem:[%s399 + $0xa0] sm:$0xff] %v891
          %1024 = vst [vmem:[%s399 + $0xa8] sm:$0xff] %v893
          %1025 = vst [vmem:[%s399 + $0xb0] sm:$0xff] %v895
          %1026 = vst [vmem:[%s399 + $0xb8] sm:$0xff] %v897
          %1027 = vst [vmem:[%s399 + $0xc0] sm:$0xff] %v901
          %1028 = vst [vmem:[%s399 + $0xc8] sm:$0xff] %v903
          %1029 = vst [vmem:[%s399 + $0xd0] sm:$0xff] %v905
          %1030 = vst [vmem:[%s399 + $0xd8] sm:$0xff] %v907
          %1031 = vst [vmem:[%s399 + $0xe0] sm:$0xff] %v911
          %1032 = vst [vmem:[%s399 + $0xe8] sm:$0xff] %v913
          %1033 = vst [vmem:[%s399 + $0xf0] sm:$0xff] %v915
          %1034 = vst [vmem:[%s399 + $0xf8] sm:$0xff] %v917
          %1035 = vst [vmem:[%s399 + $0x100] sm:$0xff] %v921
          %1036 = vst [vmem:[%s399 + $0x108] sm:$0xff] %v923
          %1037 = vst [vmem:[%s399 + $0x110] sm:$0xff] %v925
          %1038 = vst [vmem:[%s399 + $0x118] sm:$0xff] %v927
          %1039 = vst [vmem:[%s399 + $0x120] sm:$0xff] %v931
          %1040 = vst [vmem:[%s399 + $0x128] sm:$0xff] %v933
          %1041 = vst [vmem:[%s399 + $0x130] sm:$0xff] %v935
          %1042 = vst [vmem:[%s399 + $0x138] sm:$0xff] %v937
          %1043 = vst [vmem:[%s399 + $0x140] sm:$0xff] %v941
          %1044 = vst [vmem:[%s399 + $0x148] sm:$0xff] %v943
          %1045 = vst [vmem:[%s399 + $0x150] sm:$0xff] %v945
          %1046 = vst [vmem:[%s399 + $0x158] sm:$0xff] %v947
          %1047 = vst [vmem:[%s399 + $0x160] sm:$0xff] %v951
          %1048 = vst [vmem:[%s399 + $0x168] sm:$0xff] %v953
          %1049 = vst [vmem:[%s399 + $0x170] sm:$0xff] %v955
          %1050 = vst [vmem:[%s399 + $0x178] sm:$0xff] %v957
          %1051 = vst [vmem:[%s399 + $0x180] sm:$0xff] %v961
          %1052 = vst [vmem:[%s399 + $0x188] sm:$0xff] %v963
          %1053 = vst [vmem:[%s399 + $0x190] sm:$0xff] %v965
          %1054 = vst [vmem:[%s399 + $0x198] sm:$0xff] %v967
          %1055 = vst [vmem:[%s399 + $0x1a0] sm:$0xff] %v971
          %1056 = vst [vmem:[%s399 + $0x1a8] sm:$0xff] %v973
          %1057 = vst [vmem:[%s399 + $0x1b0] sm:$0xff] %v975
          %1058 = vst [vmem:[%s399 + $0x1b8] sm:$0xff] %v977
          %1059 = vst [vmem:[%s399 + $0x1c0] sm:$0xff] %v981
          %1060 = vst [vmem:[%s399 + $0x1c8] sm:$0xff] %v983
          %1061 = vst [vmem:[%s399 + $0x1d0] sm:$0xff] %v985
          %1062 = vst [vmem:[%s399 + $0x1d8] sm:$0xff] %v987
          %1063 = vst [vmem:[%s399 + $0x1e0] sm:$0xff] %v991
          %1064 = vst [vmem:[%s399 + $0x1e8] sm:$0xff] %v993
          %1065 = vst [vmem:[%s399 + $0x1f0] sm:$0xff] %v995
          %1066 = vst [vmem:[%s399 + $0x1f8] sm:$0xff] %v997
        $region74: #{mpconv_forward.1} parent=65 // pred_fallthru
          _
        %p1067 = scmp.ne.s32.totalorder %s24, 0
        // Predicated region
        $region75: #{mpconv_forward.1} parent=65 // pred_check
          %p1068 = pneg %p1067
        $region76: #{mpconv_forward.1} parent=65 // pred_check_branch
          %1070 = sbr.rel (%p1068) target = $region78
        $region77: #{mpconv_forward.1} parent=65 // pred_region
          %v1071 = vld [vmem:[%s399] sm:$0xff]
          %v1072 = vld [vmem:[%s399 + $0x8] sm:$0xff]
          %v1073 = vld [vmem:[%s399 + $0x10] sm:$0xff]
          %v1074 = vld [vmem:[%s399 + $0x18] sm:$0xff]
          %v1075 = vld [vmem:[%s399 + $0x20] sm:$0xff]
          %v1076 = vld [vmem:[%s399 + $0x28] sm:$0xff]
          %v1077 = vld [vmem:[%s399 + $0x30] sm:$0xff]
          %v1078 = vld [vmem:[%s399 + $0x38] sm:$0xff]
          %v1079 = vld [vmem:[%s399 + $0x40] sm:$0xff]
          %v1080 = vld [vmem:[%s399 + $0x48] sm:$0xff]
          %v1081 = vld [vmem:[%s399 + $0x50] sm:$0xff]
          %v1082 = vld [vmem:[%s399 + $0x58] sm:$0xff]
          %v1083 = vld [vmem:[%s399 + $0x60] sm:$0xff]
          %v1084 = vld [vmem:[%s399 + $0x68] sm:$0xff]
          %v1085 = vld [vmem:[%s399 + $0x70] sm:$0xff]
          %v1086 = vld [vmem:[%s399 + $0x78] sm:$0xff]
          %v1087 = vld [vmem:[%s399 + $0x80] sm:$0xff]
          %v1088 = vld [vmem:[%s399 + $0x88] sm:$0xff]
          %v1089 = vld [vmem:[%s399 + $0x90] sm:$0xff]
          %v1090 = vld [vmem:[%s399 + $0x98] sm:$0xff]
          %v1091 = vld [vmem:[%s399 + $0xa0] sm:$0xff]
          %v1092 = vld [vmem:[%s399 + $0xa8] sm:$0xff]
          %v1093 = vld [vmem:[%s399 + $0xb0] sm:$0xff]
          %v1094 = vld [vmem:[%s399 + $0xb8] sm:$0xff]
          %v1095 = vld [vmem:[%s399 + $0xc0] sm:$0xff]
          %v1096 = vld [vmem:[%s399 + $0xc8] sm:$0xff]
          %v1097 = vld [vmem:[%s399 + $0xd0] sm:$0xff]
          %v1098 = vld [vmem:[%s399 + $0xd8] sm:$0xff]
          %v1099 = vld [vmem:[%s399 + $0xe0] sm:$0xff]
          %v1100 = vld [vmem:[%s399 + $0xe8] sm:$0xff]
          %v1101 = vld [vmem:[%s399 + $0xf0] sm:$0xff]
          %v1102 = vld [vmem:[%s399 + $0xf8] sm:$0xff]
          %v1103 = vld [vmem:[%s399 + $0x100] sm:$0xff]
          %v1104 = vld [vmem:[%s399 + $0x108] sm:$0xff]
          %v1105 = vld [vmem:[%s399 + $0x110] sm:$0xff]
          %v1106 = vld [vmem:[%s399 + $0x118] sm:$0xff]
          %v1107 = vld [vmem:[%s399 + $0x120] sm:$0xff]
          %v1108 = vld [vmem:[%s399 + $0x128] sm:$0xff]
          %v1109 = vld [vmem:[%s399 + $0x130] sm:$0xff]
          %v1110 = vld [vmem:[%s399 + $0x138] sm:$0xff]
          %v1111 = vld [vmem:[%s399 + $0x140] sm:$0xff]
          %v1112 = vld [vmem:[%s399 + $0x148] sm:$0xff]
          %v1113 = vld [vmem:[%s399 + $0x150] sm:$0xff]
          %v1114 = vld [vmem:[%s399 + $0x158] sm:$0xff]
          %v1115 = vld [vmem:[%s399 + $0x160] sm:$0xff]
          %v1116 = vld [vmem:[%s399 + $0x168] sm:$0xff]
          %v1117 = vld [vmem:[%s399 + $0x170] sm:$0xff]
          %v1118 = vld [vmem:[%s399 + $0x178] sm:$0xff]
          %v1119 = vld [vmem:[%s399 + $0x180] sm:$0xff]
          %v1120 = vld [vmem:[%s399 + $0x188] sm:$0xff]
          %v1121 = vld [vmem:[%s399 + $0x190] sm:$0xff]
          %v1122 = vld [vmem:[%s399 + $0x198] sm:$0xff]
          %v1123 = vld [vmem:[%s399 + $0x1a0] sm:$0xff]
          %v1124 = vld [vmem:[%s399 + $0x1a8] sm:$0xff]
          %v1125 = vld [vmem:[%s399 + $0x1b0] sm:$0xff]
          %v1126 = vld [vmem:[%s399 + $0x1b8] sm:$0xff]
          %v1127 = vld [vmem:[%s399 + $0x1c0] sm:$0xff]
          %v1128 = vld [vmem:[%s399 + $0x1c8] sm:$0xff]
          %v1129 = vld [vmem:[%s399 + $0x1d0] sm:$0xff]
          %v1130 = vld [vmem:[%s399 + $0x1d8] sm:$0xff]
          %v1131 = vld [vmem:[%s399 + $0x1e0] sm:$0xff]
          %v1132 = vld [vmem:[%s399 + $0x1e8] sm:$0xff]
          %v1133 = vld [vmem:[%s399 + $0x1f0] sm:$0xff]
          %v1134 = vld [vmem:[%s399 + $0x1f8] sm:$0xff]
          %v1135 = vadd.f32 %v1071, %v841
          %v1136 = vadd.f32 %v1072, %v843
          %v1137 = vadd.f32 %v1073, %v845
          %v1138 = vadd.f32 %v1074, %v847
          %v1139 = vadd.f32 %v1075, %v851
          %v1140 = vadd.f32 %v1076, %v853
          %v1141 = vadd.f32 %v1077, %v855
          %v1142 = vadd.f32 %v1078, %v857
          %v1143 = vadd.f32 %v1079, %v861
          %v1144 = vadd.f32 %v1080, %v863
          %v1145 = vadd.f32 %v1081, %v865
          %v1146 = vadd.f32 %v1082, %v867
          %v1147 = vadd.f32 %v1083, %v871
          %v1148 = vadd.f32 %v1084, %v873
          %v1149 = vadd.f32 %v1085, %v875
          %v1150 = vadd.f32 %v1086, %v877
          %v1151 = vadd.f32 %v1087, %v881
          %v1152 = vadd.f32 %v1088, %v883
          %v1153 = vadd.f32 %v1089, %v885
          %v1154 = vadd.f32 %v1090, %v887
          %v1155 = vadd.f32 %v1091, %v891
          %v1156 = vadd.f32 %v1092, %v893
          %v1157 = vadd.f32 %v1093, %v895
          %v1158 = vadd.f32 %v1094, %v897
          %v1159 = vadd.f32 %v1095, %v901
          %v1160 = vadd.f32 %v1096, %v903
          %v1161 = vadd.f32 %v1097, %v905
          %v1162 = vadd.f32 %v1098, %v907
          %v1163 = vadd.f32 %v1099, %v911
          %v1164 = vadd.f32 %v1100, %v913
          %v1165 = vadd.f32 %v1101, %v915
          %v1166 = vadd.f32 %v1102, %v917
          %v1167 = vadd.f32 %v1103, %v921
          %v1168 = vadd.f32 %v1104, %v923
          %v1169 = vadd.f32 %v1105, %v925
          %v1170 = vadd.f32 %v1106, %v927
          %v1171 = vadd.f32 %v1107, %v931
          %v1172 = vadd.f32 %v1108, %v933
          %v1173 = vadd.f32 %v1109, %v935
          %v1174 = vadd.f32 %v1110, %v937
          %v1175 = vadd.f32 %v1111, %v941
          %v1176 = vadd.f32 %v1112, %v943
          %v1177 = vadd.f32 %v1113, %v945
          %v1178 = vadd.f32 %v1114, %v947
          %v1179 = vadd.f32 %v1115, %v951
          %v1180 = vadd.f32 %v1116, %v953
          %v1181 = vadd.f32 %v1117, %v955
          %v1182 = vadd.f32 %v1118, %v957
          %v1183 = vadd.f32 %v1119, %v961
          %v1184 = vadd.f32 %v1120, %v963
          %v1185 = vadd.f32 %v1121, %v965
          %v1186 = vadd.f32 %v1122, %v967
          %v1187 = vadd.f32 %v1123, %v971
          %v1188 = vadd.f32 %v1124, %v973
          %v1189 = vadd.f32 %v1125, %v975
          %v1190 = vadd.f32 %v1126, %v977
          %v1191 = vadd.f32 %v1127, %v981
          %v1192 = vadd.f32 %v1128, %v983
          %v1193 = vadd.f32 %v1129, %v985
          %v1194 = vadd.f32 %v1130, %v987
          %v1195 = vadd.f32 %v1131, %v991
          %v1196 = vadd.f32 %v1132, %v993
          %v1197 = vadd.f32 %v1133, %v995
          %v1198 = vadd.f32 %v1134, %v997
          %1199 = vst [vmem:[%s399] sm:$0xff] %v1135
          %1200 = vst [vmem:[%s399 + $0x8] sm:$0xff] %v1136
          %1201 = vst [vmem:[%s399 + $0x10] sm:$0xff] %v1137
          %1202 = vst [vmem:[%s399 + $0x18] sm:$0xff] %v1138
          %1203 = vst [vmem:[%s399 + $0x20] sm:$0xff] %v1139
          %1204 = vst [vmem:[%s399 + $0x28] sm:$0xff] %v1140
          %1205 = vst [vmem:[%s399 + $0x30] sm:$0xff] %v1141
          %1206 = vst [vmem:[%s399 + $0x38] sm:$0xff] %v1142
          %1207 = vst [vmem:[%s399 + $0x40] sm:$0xff] %v1143
          %1208 = vst [vmem:[%s399 + $0x48] sm:$0xff] %v1144
          %1209 = vst [vmem:[%s399 + $0x50] sm:$0xff] %v1145
          %1210 = vst [vmem:[%s399 + $0x58] sm:$0xff] %v1146
          %1211 = vst [vmem:[%s399 + $0x60] sm:$0xff] %v1147
          %1212 = vst [vmem:[%s399 + $0x68] sm:$0xff] %v1148
          %1213 = vst [vmem:[%s399 + $0x70] sm:$0xff] %v1149
          %1214 = vst [vmem:[%s399 + $0x78] sm:$0xff] %v1150
          %1215 = vst [vmem:[%s399 + $0x80] sm:$0xff] %v1151
          %1216 = vst [vmem:[%s399 + $0x88] sm:$0xff] %v1152
          %1217 = vst [vmem:[%s399 + $0x90] sm:$0xff] %v1153
          %1218 = vst [vmem:[%s399 + $0x98] sm:$0xff] %v1154
          %1219 = vst [vmem:[%s399 + $0xa0] sm:$0xff] %v1155
          %1220 = vst [vmem:[%s399 + $0xa8] sm:$0xff] %v1156
          %1221 = vst [vmem:[%s399 + $0xb0] sm:$0xff] %v1157
          %1222 = vst [vmem:[%s399 + $0xb8] sm:$0xff] %v1158
          %1223 = vst [vmem:[%s399 + $0xc0] sm:$0xff] %v1159
          %1224 = vst [vmem:[%s399 + $0xc8] sm:$0xff] %v1160
          %1225 = vst [vmem:[%s399 + $0xd0] sm:$0xff] %v1161
          %1226 = vst [vmem:[%s399 + $0xd8] sm:$0xff] %v1162
          %1227 = vst [vmem:[%s399 + $0xe0] sm:$0xff] %v1163
          %1228 = vst [vmem:[%s399 + $0xe8] sm:$0xff] %v1164
          %1229 = vst [vmem:[%s399 + $0xf0] sm:$0xff] %v1165
          %1230 = vst [vmem:[%s399 + $0xf8] sm:$0xff] %v1166
          %1231 = vst [vmem:[%s399 + $0x100] sm:$0xff] %v1167
          %1232 = vst [vmem:[%s399 + $0x108] sm:$0xff] %v1168
          %1233 = vst [vmem:[%s399 + $0x110] sm:$0xff] %v1169
          %1234 = vst [vmem:[%s399 + $0x118] sm:$0xff] %v1170
          %1235 = vst [vmem:[%s399 + $0x120] sm:$0xff] %v1171
          %1236 = vst [vmem:[%s399 + $0x128] sm:$0xff] %v1172
          %1237 = vst [vmem:[%s399 + $0x130] sm:$0xff] %v1173
          %1238 = vst [vmem:[%s399 + $0x138] sm:$0xff] %v1174
          %1239 = vst [vmem:[%s399 + $0x140] sm:$0xff] %v1175
          %1240 = vst [vmem:[%s399 + $0x148] sm:$0xff] %v1176
          %1241 = vst [vmem:[%s399 + $0x150] sm:$0xff] %v1177
          %1242 = vst [vmem:[%s399 + $0x158] sm:$0xff] %v1178
          %1243 = vst [vmem:[%s399 + $0x160] sm:$0xff] %v1179
          %1244 = vst [vmem:[%s399 + $0x168] sm:$0xff] %v1180
          %1245 = vst [vmem:[%s399 + $0x170] sm:$0xff] %v1181
          %1246 = vst [vmem:[%s399 + $0x178] sm:$0xff] %v1182
          %1247 = vst [vmem:[%s399 + $0x180] sm:$0xff] %v1183
          %1248 = vst [vmem:[%s399 + $0x188] sm:$0xff] %v1184
          %1249 = vst [vmem:[%s399 + $0x190] sm:$0xff] %v1185
          %1250 = vst [vmem:[%s399 + $0x198] sm:$0xff] %v1186
          %1251 = vst [vmem:[%s399 + $0x1a0] sm:$0xff] %v1187
          %1252 = vst [vmem:[%s399 + $0x1a8] sm:$0xff] %v1188
          %1253 = vst [vmem:[%s399 + $0x1b0] sm:$0xff] %v1189
          %1254 = vst [vmem:[%s399 + $0x1b8] sm:$0xff] %v1190
          %1255 = vst [vmem:[%s399 + $0x1c0] sm:$0xff] %v1191
          %1256 = vst [vmem:[%s399 + $0x1c8] sm:$0xff] %v1192
          %1257 = vst [vmem:[%s399 + $0x1d0] sm:$0xff] %v1193
          %1258 = vst [vmem:[%s399 + $0x1d8] sm:$0xff] %v1194
          %1259 = vst [vmem:[%s399 + $0x1e0] sm:$0xff] %v1195
          %1260 = vst [vmem:[%s399 + $0x1e8] sm:$0xff] %v1196
          %1261 = vst [vmem:[%s399 + $0x1f0] sm:$0xff] %v1197
          %1262 = vst [vmem:[%s399 + $0x1f8] sm:$0xff] %v1198
        $region78: #{mpconv_forward.1} parent=65 // pred_fallthru
          _
        %p1263 = scmp.eq.s32.totalorder %s24, 1
        // Predicated region
        $region79: #{mpconv_forward.1} parent=65 // pred_check
          %p1264 = pneg %p1263
        $region80: #{mpconv_forward.1} parent=65 // pred_check_branch
          %1266 = sbr.rel (%p1264) target = $region82
        $region81: #{mpconv_forward.1} parent=65 // pred_region
          %v1267 = vld [vmem:[%s399] sm:$0xff]
          %v1268 = vld [vmem:[%s399 + $0x8] sm:$0xff]
          %v1269 = vld [vmem:[%s399 + $0x10] sm:$0xff]
          %v1270 = vld [vmem:[%s399 + $0x18] sm:$0xff]
          %v1271 = vld [vmem:[%s399 + $0x20] sm:$0xff]
          %v1272 = vld [vmem:[%s399 + $0x28] sm:$0xff]
          %v1273 = vld [vmem:[%s399 + $0x30] sm:$0xff]
          %v1274 = vld [vmem:[%s399 + $0x38] sm:$0xff]
          %v1275 = vld [vmem:[%s399 + $0x40] sm:$0xff]
          %v1276 = vld [vmem:[%s399 + $0x48] sm:$0xff]
          %v1277 = vld [vmem:[%s399 + $0x50] sm:$0xff]
          %v1278 = vld [vmem:[%s399 + $0x58] sm:$0xff]
          %v1279 = vld [vmem:[%s399 + $0x60] sm:$0xff]
          %v1280 = vld [vmem:[%s399 + $0x68] sm:$0xff]
          %v1281 = vld [vmem:[%s399 + $0x70] sm:$0xff]
          %v1282 = vld [vmem:[%s399 + $0x78] sm:$0xff]
          %v1283 = vld [vmem:[%s399 + $0x80] sm:$0xff]
          %v1284 = vld [vmem:[%s399 + $0x88] sm:$0xff]
          %v1285 = vld [vmem:[%s399 + $0x90] sm:$0xff]
          %v1286 = vld [vmem:[%s399 + $0x98] sm:$0xff]
          %v1287 = vld [vmem:[%s399 + $0xa0] sm:$0xff]
          %v1288 = vld [vmem:[%s399 + $0xa8] sm:$0xff]
          %v1289 = vld [vmem:[%s399 + $0xb0] sm:$0xff]
          %v1290 = vld [vmem:[%s399 + $0xb8] sm:$0xff]
          %v1291 = vld [vmem:[%s399 + $0xc0] sm:$0xff]
          %v1292 = vld [vmem:[%s399 + $0xc8] sm:$0xff]
          %v1293 = vld [vmem:[%s399 + $0xd0] sm:$0xff]
          %v1294 = vld [vmem:[%s399 + $0xd8] sm:$0xff]
          %v1295 = vld [vmem:[%s399 + $0xe0] sm:$0xff]
          %v1296 = vld [vmem:[%s399 + $0xe8] sm:$0xff]
          %v1297 = vld [vmem:[%s399 + $0xf0] sm:$0xff]
          %v1298 = vld [vmem:[%s399 + $0xf8] sm:$0xff]
          %v1299 = vld [vmem:[%s399 + $0x100] sm:$0xff]
          %v1300 = vld [vmem:[%s399 + $0x108] sm:$0xff]
          %v1301 = vld [vmem:[%s399 + $0x110] sm:$0xff]
          %v1302 = vld [vmem:[%s399 + $0x118] sm:$0xff]
          %v1303 = vld [vmem:[%s399 + $0x120] sm:$0xff]
          %v1304 = vld [vmem:[%s399 + $0x128] sm:$0xff]
          %v1305 = vld [vmem:[%s399 + $0x130] sm:$0xff]
          %v1306 = vld [vmem:[%s399 + $0x138] sm:$0xff]
          %v1307 = vld [vmem:[%s399 + $0x140] sm:$0xff]
          %v1308 = vld [vmem:[%s399 + $0x148] sm:$0xff]
          %v1309 = vld [vmem:[%s399 + $0x150] sm:$0xff]
          %v1310 = vld [vmem:[%s399 + $0x158] sm:$0xff]
          %v1311 = vld [vmem:[%s399 + $0x160] sm:$0xff]
          %v1312 = vld [vmem:[%s399 + $0x168] sm:$0xff]
          %v1313 = vld [vmem:[%s399 + $0x170] sm:$0xff]
          %v1314 = vld [vmem:[%s399 + $0x178] sm:$0xff]
          %v1315 = vld [vmem:[%s399 + $0x180] sm:$0xff]
          %v1316 = vld [vmem:[%s399 + $0x188] sm:$0xff]
          %v1317 = vld [vmem:[%s399 + $0x190] sm:$0xff]
          %v1318 = vld [vmem:[%s399 + $0x198] sm:$0xff]
          %v1319 = vld [vmem:[%s399 + $0x1a0] sm:$0xff]
          %v1320 = vld [vmem:[%s399 + $0x1a8] sm:$0xff]
          %v1321 = vld [vmem:[%s399 + $0x1b0] sm:$0xff]
          %v1322 = vld [vmem:[%s399 + $0x1b8] sm:$0xff]
          %v1323 = vld [vmem:[%s399 + $0x1c0] sm:$0xff]
          %v1324 = vld [vmem:[%s399 + $0x1c8] sm:$0xff]
          %v1325 = vld [vmem:[%s399 + $0x1d0] sm:$0xff]
          %v1326 = vld [vmem:[%s399 + $0x1d8] sm:$0xff]
          %v1327 = vld [vmem:[%s399 + $0x1e0] sm:$0xff]
          %v1328 = vld [vmem:[%s399 + $0x1e8] sm:$0xff]
          %v1329 = vld [vmem:[%s399 + $0x1f0] sm:$0xff]
          %v1330 = vld [vmem:[%s399 + $0x1f8] sm:$0xff]
          %v1331 = vld [vmem:[%s418] sm:$0xff]
          %v1332 = vld [vmem:[%s418 + $0x8] sm:$0xff]
          %v1333 = vld [vmem:[%s418 + $0x10] sm:$0xff]
          %v1334 = vld [vmem:[%s418 + $0x18] sm:$0xff]
          %v1335 = vld [vmem:[%s418 + $0x20] sm:$0xff]
          %v1336 = vld [vmem:[%s418 + $0x28] sm:$0xff]
          %v1337 = vld [vmem:[%s418 + $0x30] sm:$0xff]
          %v1338 = vld [vmem:[%s418 + $0x38] sm:$0xff]
          %v1339 = vld [vmem:[%s418 + $0x40] sm:$0xff]
          %v1340 = vld [vmem:[%s418 + $0x48] sm:$0xff]
          %v1341 = vld [vmem:[%s418 + $0x50] sm:$0xff]
          %v1342 = vld [vmem:[%s418 + $0x58] sm:$0xff]
          %v1343 = vld [vmem:[%s418 + $0x60] sm:$0xff]
          %v1344 = vld [vmem:[%s418 + $0x68] sm:$0xff]
          %v1345 = vld [vmem:[%s418 + $0x70] sm:$0xff]
          %v1346 = vld [vmem:[%s418 + $0x78] sm:$0xff]
          %v1347 = vld [vmem:[%s418 + $0x80] sm:$0xff]
          %v1348 = vld [vmem:[%s418 + $0x88] sm:$0xff]
          %v1349 = vld [vmem:[%s418 + $0x90] sm:$0xff]
          %v1350 = vld [vmem:[%s418 + $0x98] sm:$0xff]
          %v1351 = vld [vmem:[%s418 + $0xa0] sm:$0xff]
          %v1352 = vld [vmem:[%s418 + $0xa8] sm:$0xff]
          %v1353 = vld [vmem:[%s418 + $0xb0] sm:$0xff]
          %v1354 = vld [vmem:[%s418 + $0xb8] sm:$0xff]
          %v1355 = vld [vmem:[%s418 + $0xc0] sm:$0xff]
          %v1356 = vld [vmem:[%s418 + $0xc8] sm:$0xff]
          %v1357 = vld [vmem:[%s418 + $0xd0] sm:$0xff]
          %v1358 = vld [vmem:[%s418 + $0xd8] sm:$0xff]
          %v1359 = vld [vmem:[%s418 + $0xe0] sm:$0xff]
          %v1360 = vld [vmem:[%s418 + $0xe8] sm:$0xff]
          %v1361 = vld [vmem:[%s418 + $0xf0] sm:$0xff]
          %v1362 = vld [vmem:[%s418 + $0xf8] sm:$0xff]
          %1364 = vset.pattern.permute.xlu0 0
          %1365 = vperm.xlu0 %1364, %v1331
          %v1366 = vpop.permute.xlu0 %1365
          %1369 = vset.pattern.permute.xlu0 0
          %1370 = vperm.xlu0 %1369, %v1332
          %v1371 = vpop.permute.xlu0 %1370
          %1374 = vset.pattern.permute.xlu0 0
          %1375 = vperm.xlu0 %1374, %v1333
          %v1376 = vpop.permute.xlu0 %1375
          %1379 = vset.pattern.permute.xlu0 0
          %1380 = vperm.xlu0 %1379, %v1334
          %v1381 = vpop.permute.xlu0 %1380
          %1384 = vset.pattern.permute.xlu0 0
          %1385 = vperm.xlu0 %1384, %v1335
          %v1386 = vpop.permute.xlu0 %1385
          %1389 = vset.pattern.permute.xlu0 0
          %1390 = vperm.xlu0 %1389, %v1336
          %v1391 = vpop.permute.xlu0 %1390
          %1394 = vset.pattern.permute.xlu0 0
          %1395 = vperm.xlu0 %1394, %v1337
          %v1396 = vpop.permute.xlu0 %1395
          %1399 = vset.pattern.permute.xlu0 0
          %1400 = vperm.xlu0 %1399, %v1338
          %v1401 = vpop.permute.xlu0 %1400
          %1404 = vset.pattern.permute.xlu0 0
          %1405 = vperm.xlu0 %1404, %v1339
          %v1406 = vpop.permute.xlu0 %1405
          %1409 = vset.pattern.permute.xlu0 0
          %1410 = vperm.xlu0 %1409, %v1340
          %v1411 = vpop.permute.xlu0 %1410
          %1414 = vset.pattern.permute.xlu0 0
          %1415 = vperm.xlu0 %1414, %v1341
          %v1416 = vpop.permute.xlu0 %1415
          %1419 = vset.pattern.permute.xlu0 0
          %1420 = vperm.xlu0 %1419, %v1342
          %v1421 = vpop.permute.xlu0 %1420
          %1424 = vset.pattern.permute.xlu0 0
          %1425 = vperm.xlu0 %1424, %v1343
          %v1426 = vpop.permute.xlu0 %1425
          %1429 = vset.pattern.permute.xlu0 0
          %1430 = vperm.xlu0 %1429, %v1344
          %v1431 = vpop.permute.xlu0 %1430
          %1434 = vset.pattern.permute.xlu0 0
          %1435 = vperm.xlu0 %1434, %v1345
          %v1436 = vpop.permute.xlu0 %1435
          %1439 = vset.pattern.permute.xlu0 0
          %1440 = vperm.xlu0 %1439, %v1346
          %v1441 = vpop.permute.xlu0 %1440
          %1444 = vset.pattern.permute.xlu0 0
          %1445 = vperm.xlu0 %1444, %v1347
          %v1446 = vpop.permute.xlu0 %1445
          %1449 = vset.pattern.permute.xlu0 0
          %1450 = vperm.xlu0 %1449, %v1348
          %v1451 = vpop.permute.xlu0 %1450
          %1454 = vset.pattern.permute.xlu0 0
          %1455 = vperm.xlu0 %1454, %v1349
          %v1456 = vpop.permute.xlu0 %1455
          %1459 = vset.pattern.permute.xlu0 0
          %1460 = vperm.xlu0 %1459, %v1350
          %v1461 = vpop.permute.xlu0 %1460
          %1464 = vset.pattern.permute.xlu0 0
          %1465 = vperm.xlu0 %1464, %v1351
          %v1466 = vpop.permute.xlu0 %1465
          %1469 = vset.pattern.permute.xlu0 0
          %1470 = vperm.xlu0 %1469, %v1352
          %v1471 = vpop.permute.xlu0 %1470
          %1474 = vset.pattern.permute.xlu0 0
          %1475 = vperm.xlu0 %1474, %v1353
          %v1476 = vpop.permute.xlu0 %1475
          %1479 = vset.pattern.permute.xlu0 0
          %1480 = vperm.xlu0 %1479, %v1354
          %v1481 = vpop.permute.xlu0 %1480
          %1484 = vset.pattern.permute.xlu0 0
          %1485 = vperm.xlu0 %1484, %v1355
          %v1486 = vpop.permute.xlu0 %1485
          %1489 = vset.pattern.permute.xlu0 0
          %1490 = vperm.xlu0 %1489, %v1356
          %v1491 = vpop.permute.xlu0 %1490
          %1494 = vset.pattern.permute.xlu0 0
          %1495 = vperm.xlu0 %1494, %v1357
          %v1496 = vpop.permute.xlu0 %1495
          %1499 = vset.pattern.permute.xlu0 0
          %1500 = vperm.xlu0 %1499, %v1358
          %v1501 = vpop.permute.xlu0 %1500
          %1504 = vset.pattern.permute.xlu0 0
          %1505 = vperm.xlu0 %1504, %v1359
          %v1506 = vpop.permute.xlu0 %1505
          %1509 = vset.pattern.permute.xlu0 0
          %1510 = vperm.xlu0 %1509, %v1360
          %v1511 = vpop.permute.xlu0 %1510
          %1514 = vset.pattern.permute.xlu0 0
          %1515 = vperm.xlu0 %1514, %v1361
          %v1516 = vpop.permute.xlu0 %1515
          %1519 = vset.pattern.permute.xlu0 0
          %1520 = vperm.xlu0 %1519, %v1362
          %v1521 = vpop.permute.xlu0 %1520
          %v1523 = vmul.f32 %v1267, %v1366
          %v1524 = vmul.f32 %v1268, %v1366
          %v1525 = vmul.f32 %v1269, %v1371
          %v1526 = vmul.f32 %v1270, %v1371
          %v1527 = vmul.f32 %v1271, %v1376
          %v1528 = vmul.f32 %v1272, %v1376
          %v1529 = vmul.f32 %v1273, %v1381
          %v1530 = vmul.f32 %v1274, %v1381
          %v1531 = vmul.f32 %v1275, %v1386
          %v1532 = vmul.f32 %v1276, %v1386
          %v1533 = vmul.f32 %v1277, %v1391
          %v1534 = vmul.f32 %v1278, %v1391
          %v1535 = vmul.f32 %v1279, %v1396
          %v1536 = vmul.f32 %v1280, %v1396
          %v1537 = vmul.f32 %v1281, %v1401
          %v1538 = vmul.f32 %v1282, %v1401
          %v1539 = vmul.f32 %v1283, %v1406
          %v1540 = vmul.f32 %v1284, %v1406
          %v1541 = vmul.f32 %v1285, %v1411
          %v1542 = vmul.f32 %v1286, %v1411
          %v1543 = vmul.f32 %v1287, %v1416
          %v1544 = vmul.f32 %v1288, %v1416
          %v1545 = vmul.f32 %v1289, %v1421
          %v1546 = vmul.f32 %v1290, %v1421
          %v1547 = vmul.f32 %v1291, %v1426
          %v1548 = vmul.f32 %v1292, %v1426
          %v1549 = vmul.f32 %v1293, %v1431
          %v1550 = vmul.f32 %v1294, %v1431
          %v1551 = vmul.f32 %v1295, %v1436
          %v1552 = vmul.f32 %v1296, %v1436
          %v1553 = vmul.f32 %v1297, %v1441
          %v1554 = vmul.f32 %v1298, %v1441
          %v1555 = vmul.f32 %v1299, %v1446
          %v1556 = vmul.f32 %v1300, %v1446
          %v1557 = vmul.f32 %v1301, %v1451
          %v1558 = vmul.f32 %v1302, %v1451
          %v1559 = vmul.f32 %v1303, %v1456
          %v1560 = vmul.f32 %v1304, %v1456
          %v1561 = vmul.f32 %v1305, %v1461
          %v1562 = vmul.f32 %v1306, %v1461
          %v1563 = vmul.f32 %v1307, %v1466
          %v1564 = vmul.f32 %v1308, %v1466
          %v1565 = vmul.f32 %v1309, %v1471
          %v1566 = vmul.f32 %v1310, %v1471
          %v1567 = vmul.f32 %v1311, %v1476
          %v1568 = vmul.f32 %v1312, %v1476
          %v1569 = vmul.f32 %v1313, %v1481
          %v1570 = vmul.f32 %v1314, %v1481
          %v1571 = vmul.f32 %v1315, %v1486
          %v1572 = vmul.f32 %v1316, %v1486
          %v1573 = vmul.f32 %v1317, %v1491
          %v1574 = vmul.f32 %v1318, %v1491
          %v1575 = vmul.f32 %v1319, %v1496
          %v1576 = vmul.f32 %v1320, %v1496
          %v1577 = vmul.f32 %v1321, %v1501
          %v1578 = vmul.f32 %v1322, %v1501
          %v1579 = vmul.f32 %v1323, %v1506
          %v1580 = vmul.f32 %v1324, %v1506
          %v1581 = vmul.f32 %v1325, %v1511
          %v1582 = vmul.f32 %v1326, %v1511
          %v1583 = vmul.f32 %v1327, %v1516
          %v1584 = vmul.f32 %v1328, %v1516
          %v1585 = vmul.f32 %v1329, %v1521
          %v1586 = vmul.f32 %v1330, %v1521
          %1587 = vst [vmem:[%s399] sm:$0xff] %v1523
          %1588 = vst [vmem:[%s399 + $0x8] sm:$0xff] %v1524
          %1589 = vst [vmem:[%s399 + $0x10] sm:$0xff] %v1525
          %1590 = vst [vmem:[%s399 + $0x18] sm:$0xff] %v1526
          %1591 = vst [vmem:[%s399 + $0x20] sm:$0xff] %v1527
          %1592 = vst [vmem:[%s399 + $0x28] sm:$0xff] %v1528
          %1593 = vst [vmem:[%s399 + $0x30] sm:$0xff] %v1529
          %1594 = vst [vmem:[%s399 + $0x38] sm:$0xff] %v1530
          %1595 = vst [vmem:[%s399 + $0x40] sm:$0xff] %v1531
          %1596 = vst [vmem:[%s399 + $0x48] sm:$0xff] %v1532
          %1597 = vst [vmem:[%s399 + $0x50] sm:$0xff] %v1533
          %1598 = vst [vmem:[%s399 + $0x58] sm:$0xff] %v1534
          %1599 = vst [vmem:[%s399 + $0x60] sm:$0xff] %v1535
          %1600 = vst [vmem:[%s399 + $0x68] sm:$0xff] %v1536
          %1601 = vst [vmem:[%s399 + $0x70] sm:$0xff] %v1537
          %1602 = vst [vmem:[%s399 + $0x78] sm:$0xff] %v1538
          %1603 = vst [vmem:[%s399 + $0x80] sm:$0xff] %v1539
          %1604 = vst [vmem:[%s399 + $0x88] sm:$0xff] %v1540
          %1605 = vst [vmem:[%s399 + $0x90] sm:$0xff] %v1541
          %1606 = vst [vmem:[%s399 + $0x98] sm:$0xff] %v1542
          %1607 = vst [vmem:[%s399 + $0xa0] sm:$0xff] %v1543
          %1608 = vst [vmem:[%s399 + $0xa8] sm:$0xff] %v1544
          %1609 = vst [vmem:[%s399 + $0xb0] sm:$0xff] %v1545
          %1610 = vst [vmem:[%s399 + $0xb8] sm:$0xff] %v1546
          %1611 = vst [vmem:[%s399 + $0xc0] sm:$0xff] %v1547
          %1612 = vst [vmem:[%s399 + $0xc8] sm:$0xff] %v1548
          %1613 = vst [vmem:[%s399 + $0xd0] sm:$0xff] %v1549
          %1614 = vst [vmem:[%s399 + $0xd8] sm:$0xff] %v1550
          %1615 = vst [vmem:[%s399 + $0xe0] sm:$0xff] %v1551
          %1616 = vst [vmem:[%s399 + $0xe8] sm:$0xff] %v1552
          %1617 = vst [vmem:[%s399 + $0xf0] sm:$0xff] %v1553
          %1618 = vst [vmem:[%s399 + $0xf8] sm:$0xff] %v1554
          %1619 = vst [vmem:[%s399 + $0x100] sm:$0xff] %v1555
          %1620 = vst [vmem:[%s399 + $0x108] sm:$0xff] %v1556
          %1621 = vst [vmem:[%s399 + $0x110] sm:$0xff] %v1557
          %1622 = vst [vmem:[%s399 + $0x118] sm:$0xff] %v1558
          %1623 = vst [vmem:[%s399 + $0x120] sm:$0xff] %v1559
          %1624 = vst [vmem:[%s399 + $0x128] sm:$0xff] %v1560
          %1625 = vst [vmem:[%s399 + $0x130] sm:$0xff] %v1561
          %1626 = vst [vmem:[%s399 + $0x138] sm:$0xff] %v1562
          %1627 = vst [vmem:[%s399 + $0x140] sm:$0xff] %v1563
          %1628 = vst [vmem:[%s399 + $0x148] sm:$0xff] %v1564
          %1629 = vst [vmem:[%s399 + $0x150] sm:$0xff] %v1565
          %1630 = vst [vmem:[%s399 + $0x158] sm:$0xff] %v1566
          %1631 = vst [vmem:[%s399 + $0x160] sm:$0xff] %v1567
          %1632 = vst [vmem:[%s399 + $0x168] sm:$0xff] %v1568
          %1633 = vst [vmem:[%s399 + $0x170] sm:$0xff] %v1569
          %1634 = vst [vmem:[%s399 + $0x178] sm:$0xff] %v1570
          %1635 = vst [vmem:[%s399 + $0x180] sm:$0xff] %v1571
          %1636 = vst [vmem:[%s399 + $0x188] sm:$0xff] %v1572
          %1637 = vst [vmem:[%s399 + $0x190] sm:$0xff] %v1573
          %1638 = vst [vmem:[%s399 + $0x198] sm:$0xff] %v1574
          %1639 = vst [vmem:[%s399 + $0x1a0] sm:$0xff] %v1575
          %1640 = vst [vmem:[%s399 + $0x1a8] sm:$0xff] %v1576
          %1641 = vst [vmem:[%s399 + $0x1b0] sm:$0xff] %v1577
          %1642 = vst [vmem:[%s399 + $0x1b8] sm:$0xff] %v1578
          %1643 = vst [vmem:[%s399 + $0x1c0] sm:$0xff] %v1579
          %1644 = vst [vmem:[%s399 + $0x1c8] sm:$0xff] %v1580
          %1645 = vst [vmem:[%s399 + $0x1d0] sm:$0xff] %v1581
          %1646 = vst [vmem:[%s399 + $0x1d8] sm:$0xff] %v1582
          %1647 = vst [vmem:[%s399 + $0x1e0] sm:$0xff] %v1583
          %1648 = vst [vmem:[%s399 + $0x1e8] sm:$0xff] %v1584
          %1649 = vst [vmem:[%s399 + $0x1f0] sm:$0xff] %v1585
          %1650 = vst [vmem:[%s399 + $0x1f8] sm:$0xff] %v1586
        $region82: #{mpconv_forward.1} parent=65 // pred_fallthru
          _
        %s1651 = sand.u32 %s128, 1
        %s1652 = scalar_lea.sflag [#allocation4], %s1651
        %s1653 = sand.u32 %s128, 1
        %s1654 = smul.addr %s1653, 512
        %s1655 = scalar_lea.vmem [#allocation3], %s1654
        // Predicated region
        $region83: #{mpconv_forward.1} parent=65 // pred_check
          %p1656 = pneg %p138
        $region84: #{mpconv_forward.1} parent=65 // pred_check_branch
          %1658 = sbr.rel (%p1656) target = $region86
        $region85: #{mpconv_forward.1} parent=65 // pred_region
          %s1659 = smul.u32 32, %s22
          %s1660 = smul.u32 2, %s23
          %s1662 = ssub.s32 8192, 8192
          %1663 = vsyncadd %s1652, %s1662
          %s1664 = smul.addr %s1659, 2
          %s1665 = sadd.s32 %s1660, %s1664
          %s1666 = smul.addr %s1665, 128
          %s1667 = scalar_lea.hbm %s3, %s1666
          %s1668 = sshll.u32 %s1655, 4
          %s1669 = int_to_ptr.vmem [resolvable:$true] %s1668
          %1674 = dma.vmem_to_hbm [thread:$0]  %s1669, 8192, %s1667, %s1652, 256, 256, 16
        $region86: #{mpconv_forward.1} parent=65 // pred_fallthru
          _
      $region66: #{mpconv_forward.1} parent=5 // pred_fallthru
        _
      %p1675 = scmp.le.s32.totalorder 2, %s12
      // Predicated region
      $region87: #{mpconv_forward.1} parent=5 // pred_check
        %p1676 = pneg %p1675
      $region88: #{mpconv_forward.1} parent=5 // pred_check_branch
        %1678 = sbr.rel (%p1676) target = $region90
      $region89: #{mpconv_forward.1} parent=5 // pred_region
        %s1679 = ssub.s32 %s12, 2
        // Predicated region
        $region91: #{mpconv_forward.1} parent=89 // pred_check
          %p1680 = pneg %p144
        $region92: #{mpconv_forward.1} parent=89 // pred_check_branch
          %1682 = sbr.rel (%p1680) target = $region94
        $region93: #{mpconv_forward.1} parent=89 // pred_region
          %s1683 = sand.u32 %s129, 1
          %s1684 = scalar_lea.sflag [#allocation4], %s1683
          %s1685 = sand.u32 %s129, 1
          %s1686 = smul.addr %s1685, 512
          %s1687 = scalar_lea.vmem [#allocation3], %s1686
          %1688 = dma.done %s1684, 8192
        $region94: #{mpconv_forward.1} parent=89 // pred_fallthru
          _
      $region90: #{mpconv_forward.1} parent=5 // pred_fallthru
        _
    $region6: #{mpconv_forward.1} parent=1 // loop_footer
      %s16 = sadd.s32 1, %s12
    $region7: #{mpconv_forward.1} parent=1 // loop_footer_branch
      %11 = sbr.rel target = $region3
    $region8: #{mpconv_forward.1} parent=1 // loop_exit
      _
    %1689 = vsyncpa [#allocation4], 1
    %s1690 = scalar_lea.sflag [#allocation4], 1
    %1691 = vsyncpa %s1690, 1

</llo_original>
